<compile_context>
chip_gen: v7x
topology: tpu7x:2x2x1
jax: 0.10.0
libtpu: 0.0.40
codegen_flags: <defaults>
</compile_context>

<pallas_src>
import jax
import jax.numpy as jnp
from jax.experimental import pallas as pl
from jax.experimental.pallas import tpu as pltpu

# sizes hard-coded by the module's build(): A3TGCN2(102, 256, 8, 32), Linear(256, 1)
F_IN = 102
F_PAD = 128          # F_IN zero-padded to a full lane tile
F_OUT = 256
PERIODS = 8


def a3tgcn_fused_kernel(attn_ref,      # SMEM (P,)        softmax'ed attention
                        ba_ref,        # SMEM (1,)        final-linear bias
                        x_ref,         # (1, P, N, F_PAD) bf16  one batch element
                        a_ref,         # (N, N)           bf16  normalized adjacency (resident)
                        wg_ref,        # (F_PAD, 2*F_OUT) bf16  fused GCN x gate-linear weights
                        bg_ref,        # (1, 2*F_OUT)     f32   fused biases
                        wa_ref,        # (1, F_OUT)       f32   after-model Linear weight row
                        out_ref):      # (1, 1, N)        f32
    x = x_ref[0]                       # (P, N, F_PAD)
    P, N, _ = x.shape
    a = a_ref[...]

    # A_hat @ X per period: P tiny (N,N)@(N,F_PAD) MXU matmuls with f32
    # accumulation, stacked into one (P*N, F_PAD) slab for the big matmul.
    ax = jnp.concatenate(
        [jnp.dot(a, x[p], preferred_element_type=jnp.float32) for p in range(P)],
        axis=0).astype(jnp.bfloat16)                           # (P*N, F_PAD)

    # Single (P*N,128)@(128,512) matmul: GCN weights folded offline with the
    # gate linears (no nonlinearity in between); z | h halves side by side.
    c = jnp.dot(ax, wg_ref[...], preferred_element_type=jnp.float32) + bg_ref[...]
    z = jax.nn.sigmoid(c[:, :F_OUT])
    h_tilde = jnp.tanh(c[:, F_OUT:])
    h = ((1.0 - z) * h_tilde).reshape(P, N, F_OUT)             # H==0 -> h_new=(1-z)*h_tilde

    # Attention-weighted period sum (P=8 VPU scale-adds), ReLU, Linear(256->1)
    # done as a VPU multiply + lane reduction.
    acc = attn_ref[0] * h[0]
    for p in range(1, P):
        acc = acc + attn_ref[p] * h[p]
    hid = jnp.maximum(acc, 0.0)                                # (N, F_OUT)
    y = jnp.sum(hid * wa_ref[...], axis=-1) + ba_ref[0]        # (N,)
    out_ref[...] = y.reshape(1, 1, N)


def gcn_norm_dense(edge_index, num_nodes):
    """Dense D^-1/2 (A + I) D^-1/2, matching PyG gcn_norm message direction."""
    src, dst = edge_index[0], edge_index[1]
    a = jnp.zeros((num_nodes, num_nodes), jnp.float32).at[dst, src].add(1.0)
    eye = jnp.eye(num_nodes, dtype=bool)
    a = jnp.where(eye, jnp.maximum(a, 1.0), a)   # add remaining self-loops
    deg = a.sum(axis=1)
    dinv = jnp.where(deg > 0, jax.lax.rsqrt(deg), 0.0)
    return dinv[:, None] * a * dinv[None, :]


def different_models_forward(node_features, edge_index, params):
    """node_features: (B, N, F_IN, PERIODS) float32; returns (B*N, 1) float32."""
    B, N, f_in, P = node_features.shape
    assert f_in == F_IN and P == PERIODS
    assert N % 8 == 0                    # keeps the in-kernel reshapes tile-aligned

    # (B, N, F, P) -> (B, P, N, F); pad features 102 -> 128 (zero columns/rows
    # keep the product exact); cast matmul operands to bf16 (f32 accumulate).
    x = jnp.transpose(node_features, (0, 3, 1, 2))
    x = jnp.pad(x, ((0, 0), (0, 0), (0, 0), (0, F_PAD - F_IN))).astype(jnp.bfloat16)

    a_hat = gcn_norm_dense(edge_index, N).astype(jnp.bfloat16)
    attn = jax.nn.softmax(params['attention'])

    # Offline fusion (would be precomputed once per checkpoint in deployment):
    #   z = sigmoid((A@X) @ (Wz @ wlz_top) + (bz @ wlz_top + blz)), likewise h.
    # H == 0 every period, so only the top F_OUT rows of wlz/wlh are live and
    # the reset gate / z*H term vanish.
    wlz_t = params['wlz'][:F_OUT]
    wlh_t = params['wlh'][:F_OUT]
    wz_f = jnp.pad(params['wz'], ((0, F_PAD - F_IN), (0, 0))) @ wlz_t     # (128, 256)
    wh_f = jnp.pad(params['wh'], ((0, F_PAD - F_IN), (0, 0))) @ wlh_t     # (128, 256)
    wg = jnp.concatenate([wz_f, wh_f], axis=1).astype(jnp.bfloat16)       # (128, 512)
    bg = jnp.concatenate([params['bz'] @ wlz_t + params['blz'],
                          params['bh'] @ wlh_t + params['blh']], axis=1)  # (1, 512)
    wa_row = params['wa'].reshape(1, F_OUT)                               # (1, 256)
    ba = params['ba'].reshape(1)                                          # (1,)

    smem = pl.BlockSpec(memory_space=pltpu.MemorySpace.SMEM)
    res2 = lambda b: (0, 0)              # resident 2-D operands (constant block)
    in_specs = [
        smem,                                                    # attn
        smem,                                                    # ba
        pl.BlockSpec((1, P, N, F_PAD), lambda b: (b, 0, 0, 0)),  # x: one batch / step
        pl.BlockSpec((N, N), res2),                              # A_hat
        pl.BlockSpec((F_PAD, 2 * F_OUT), res2),                  # wg (fused)
        pl.BlockSpec((1, 2 * F_OUT), res2),                      # bg (fused)
        pl.BlockSpec((1, F_OUT), res2),                          # wa
    ]

    out = pl.pallas_call(
        a3tgcn_fused_kernel,
        out_shape=jax.ShapeDtypeStruct((B, 1, N), jnp.float32),
        grid=(B,),
        in_specs=in_specs,
        out_specs=pl.BlockSpec((1, 1, N), lambda b: (b, 0, 0)),
        compiler_params=pltpu.CompilerParams(
            dimension_semantics=("parallel",),       # use both TCs on v7x megacore
            vmem_limit_bytes=32 * 1024 * 1024),
    )(attn, ba, x, a_hat, wg, bg, wa_row)

    # torch: out.flatten(end_dim=1) -> Linear(256, 1)   (Linear fused in-kernel)
    return out.reshape(B * N, 1)


def reference_forward(node_features, edge_index, params):
    """Pure-JAX f32 reference of the full (un-pruned) module math."""
    B, N, _, P = node_features.shape
    a_hat = gcn_norm_dense(edge_index, N)
    attn = jax.nn.softmax(params['attention'])
    h_acc = jnp.zeros((B, N, F_OUT), jnp.float32)
    for t in range(P):
        xt = node_features[..., t]
        gcn = lambda w, b: jnp.einsum('mn,bno->bmo', a_hat, xt @ w) + b
        cz = gcn(params['wz'], params['bz'])
        cr = gcn(params['wr'], params['br'])
        ch = gcn(params['wh'], params['bh'])
        h = jnp.zeros((B, N, F_OUT), jnp.float32)
        z = jax.nn.sigmoid(jnp.concatenate([cz, h], -1) @ params['wlz'] + params['blz'])
        r = jax.nn.sigmoid(jnp.concatenate([cr, h], -1) @ params['wlr'] + params['blr'])
        ht = jnp.tanh(jnp.concatenate([ch, h * r], -1) @ params['wlh'] + params['blh'])
        h_acc = h_acc + attn[t] * (z * h + (1.0 - z) * ht)
    out = jnp.maximum(h_acc, 0.0).reshape(B * N, F_OUT)
    return out @ params['wa'] + params['ba']


def init_params(key):
    """Deterministic synthetic weights. Linear weights stored as (in, out)."""
    ks = jax.random.split(key, 12)
    w = lambda k, shape, fan: jax.random.normal(k, shape, jnp.float32) / jnp.sqrt(fan)
    return {
        'attention': jax.random.uniform(ks[0], (PERIODS,), jnp.float32),
        'wz': w(ks[1], (F_IN, F_OUT), F_IN),
        'wr': w(ks[2], (F_IN, F_OUT), F_IN),
        'wh': w(ks[3], (F_IN, F_OUT), F_IN),
        'bz': jnp.zeros((1, F_OUT), jnp.float32),
        'br': jnp.zeros((1, F_OUT), jnp.float32),
        'bh': jnp.zeros((1, F_OUT), jnp.float32),
        'wlz': w(ks[4], (2 * F_OUT, F_OUT), 2 * F_OUT),
        'wlr': w(ks[5], (2 * F_OUT, F_OUT), 2 * F_OUT),
        'wlh': w(ks[6], (2 * F_OUT, F_OUT), 2 * F_OUT),
        'blz': 0.01 * jax.random.normal(ks[7], (1, F_OUT), jnp.float32),
        'blr': 0.01 * jax.random.normal(ks[8], (1, F_OUT), jnp.float32),
        'blh': 0.01 * jax.random.normal(ks[9], (1, F_OUT), jnp.float32),
        'wa': w(ks[10], (F_OUT, 1), F_OUT),
        'ba': jnp.zeros((1, 1), jnp.float32),
    }


if __name__ == "__main__":
    B, N, E = 2, 16, 48                       # small graph; channels/periods from __init__
    key = jax.random.PRNGKey(0)
    k_x, k_src, k_dst, k_p = jax.random.split(key, 4)

    node_features = jax.random.normal(k_x, (B, N, F_IN, PERIODS), jnp.float32)
    edge_index = jnp.stack([jax.random.randint(k_src, (E,), 0, N),
                            jax.random.randint(k_dst, (E,), 0, N)])
    params = init_params(k_p)

    out = jax.block_until_ready(different_models_forward(node_features, edge_index, params))
    assert out.shape == (B * N, 1)

    ref = reference_forward(node_features, edge_index, params)
    # Tolerance relaxed vs. a pure-f32 kernel: matmul operands are bf16 (f32
    # accumulation) and the offline Wz@wlz / Wh@wlh fusion changes f32 rounding
    # order.  Both effects are well inside 2e-2.
    err = float(jnp.abs(out - ref).max())
    assert jnp.allclose(out, ref, rtol=2e-2, atol=2e-2), err

    print("KERNEL_OK")
</pallas_src>

<mosaic_0001>
module attributes {stable_mosaic.version = 11 : i64} {
  func.func @a3tgcn_fused_kernel(%arg0: i32, %arg1: memref<8xf32, #tpu.memory_space<smem>>, %arg2: memref<1xf32, #tpu.memory_space<smem>>, %arg3: memref<1x8x16x128xbf16, #tpu.memory_space<vmem>>, %arg4: memref<16x16xbf16, #tpu.memory_space<vmem>>, %arg5: memref<128x512xbf16, #tpu.memory_space<vmem>>, %arg6: memref<1x512xf32, #tpu.memory_space<vmem>>, %arg7: memref<1x256xf32, #tpu.memory_space<vmem>>, %arg8: memref<1x1x16xf32, #tpu.memory_space<vmem>>) attributes {dimension_semantics = [#tpu.dimension_semantics<parallel>], iteration_bounds = array<i64: 2>, scalar_prefetch = 0 : i64, scratch_operands = 0 : i64, tpu.core_type = #tpu.core_type<tc>, window_params = [{transform_indices = @transform_0, window_bounds = array<i64: 8>}, {transform_indices = @transform_1, window_bounds = array<i64: 1>}, {transform_indices = @transform_2, window_bounds = array<i64: 1, 8, 16, 128>}, {pipeline_mode = #tpu.pipeline_mode<synchronous>, transform_indices = @transform_3, window_bounds = array<i64: 16, 16>}, {pipeline_mode = #tpu.pipeline_mode<synchronous>, transform_indices = @transform_4, window_bounds = array<i64: 128, 512>}, {pipeline_mode = #tpu.pipeline_mode<synchronous>, transform_indices = @transform_5, window_bounds = array<i64: 1, 512>}, {pipeline_mode = #tpu.pipeline_mode<synchronous>, transform_indices = @transform_6, window_bounds = array<i64: 1, 256>}, {transform_indices = @transform_7, window_bounds = array<i64: 1, 1, 16>}]} {
    %c0 = arith.constant 0 : index
    %c0_0 = arith.constant 0 : index
    %c0_1 = arith.constant 0 : index
    %c0_2 = arith.constant 0 : index
    %0 = vector.load %arg3[%c0, %c0_0, %c0_1, %c0_2] : memref<1x8x16x128xbf16, #tpu.memory_space<vmem>>, vector<1x8x16x128xbf16>
    %1 = vector.shape_cast %0 : vector<1x8x16x128xbf16> to vector<8x16x128xbf16>
    %c0_3 = arith.constant 0 : index
    %c0_4 = arith.constant 0 : index
    %2 = vector.load %arg4[%c0_3, %c0_4] : memref<16x16xbf16, #tpu.memory_space<vmem>>, vector<16x16xbf16>
    %3 = vector.extract_strided_slice %1 {offsets = [0, 0, 0], sizes = [1, 16, 128], strides = [1, 1, 1]} : vector<8x16x128xbf16> to vector<1x16x128xbf16>
    %4 = vector.shape_cast %3 : vector<1x16x128xbf16> to vector<16x128xbf16>
    %cst = arith.constant dense<0.000000e+00> : vector<16x128xf32>
    %5 = tpu.matmul %2, %4, %cst {dimension_numbers = #tpu.dot_dimension_numbers<[1], [0], [0], [1], [0, 0, 1, 1], [], []>} : vector<16x16xbf16>, vector<16x128xbf16>, vector<16x128xf32> -> vector<16x128xf32>
    %6 = vector.extract_strided_slice %1 {offsets = [1, 0, 0], sizes = [1, 16, 128], strides = [1, 1, 1]} : vector<8x16x128xbf16> to vector<1x16x128xbf16>
    %7 = vector.shape_cast %6 : vector<1x16x128xbf16> to vector<16x128xbf16>
    %cst_5 = arith.constant dense<0.000000e+00> : vector<16x128xf32>
    %8 = tpu.matmul %2, %7, %cst_5 {dimension_numbers = #tpu.dot_dimension_numbers<[1], [0], [0], [1], [0, 0, 1, 1], [], []>} : vector<16x16xbf16>, vector<16x128xbf16>, vector<16x128xf32> -> vector<16x128xf32>
    %9 = vector.extract_strided_slice %1 {offsets = [2, 0, 0], sizes = [1, 16, 128], strides = [1, 1, 1]} : vector<8x16x128xbf16> to vector<1x16x128xbf16>
    %10 = vector.shape_cast %9 : vector<1x16x128xbf16> to vector<16x128xbf16>
    %cst_6 = arith.constant dense<0.000000e+00> : vector<16x128xf32>
    %11 = tpu.matmul %2, %10, %cst_6 {dimension_numbers = #tpu.dot_dimension_numbers<[1], [0], [0], [1], [0, 0, 1, 1], [], []>} : vector<16x16xbf16>, vector<16x128xbf16>, vector<16x128xf32> -> vector<16x128xf32>
    %12 = vector.extract_strided_slice %1 {offsets = [3, 0, 0], sizes = [1, 16, 128], strides = [1, 1, 1]} : vector<8x16x128xbf16> to vector<1x16x128xbf16>
    %13 = vector.shape_cast %12 : vector<1x16x128xbf16> to vector<16x128xbf16>
    %cst_7 = arith.constant dense<0.000000e+00> : vector<16x128xf32>
    %14 = tpu.matmul %2, %13, %cst_7 {dimension_numbers = #tpu.dot_dimension_numbers<[1], [0], [0], [1], [0, 0, 1, 1], [], []>} : vector<16x16xbf16>, vector<16x128xbf16>, vector<16x128xf32> -> vector<16x128xf32>
    %15 = vector.extract_strided_slice %1 {offsets = [4, 0, 0], sizes = [1, 16, 128], strides = [1, 1, 1]} : vector<8x16x128xbf16> to vector<1x16x128xbf16>
    %16 = vector.shape_cast %15 : vector<1x16x128xbf16> to vector<16x128xbf16>
    %cst_8 = arith.constant dense<0.000000e+00> : vector<16x128xf32>
    %17 = tpu.matmul %2, %16, %cst_8 {dimension_numbers = #tpu.dot_dimension_numbers<[1], [0], [0], [1], [0, 0, 1, 1], [], []>} : vector<16x16xbf16>, vector<16x128xbf16>, vector<16x128xf32> -> vector<16x128xf32>
    %18 = vector.extract_strided_slice %1 {offsets = [5, 0, 0], sizes = [1, 16, 128], strides = [1, 1, 1]} : vector<8x16x128xbf16> to vector<1x16x128xbf16>
    %19 = vector.shape_cast %18 : vector<1x16x128xbf16> to vector<16x128xbf16>
    %cst_9 = arith.constant dense<0.000000e+00> : vector<16x128xf32>
    %20 = tpu.matmul %2, %19, %cst_9 {dimension_numbers = #tpu.dot_dimension_numbers<[1], [0], [0], [1], [0, 0, 1, 1], [], []>} : vector<16x16xbf16>, vector<16x128xbf16>, vector<16x128xf32> -> vector<16x128xf32>
    %21 = vector.extract_strided_slice %1 {offsets = [6, 0, 0], sizes = [1, 16, 128], strides = [1, 1, 1]} : vector<8x16x128xbf16> to vector<1x16x128xbf16>
    %22 = vector.shape_cast %21 : vector<1x16x128xbf16> to vector<16x128xbf16>
    %cst_10 = arith.constant dense<0.000000e+00> : vector<16x128xf32>
    %23 = tpu.matmul %2, %22, %cst_10 {dimension_numbers = #tpu.dot_dimension_numbers<[1], [0], [0], [1], [0, 0, 1, 1], [], []>} : vector<16x16xbf16>, vector<16x128xbf16>, vector<16x128xf32> -> vector<16x128xf32>
    %24 = vector.extract_strided_slice %1 {offsets = [7, 0, 0], sizes = [1, 16, 128], strides = [1, 1, 1]} : vector<8x16x128xbf16> to vector<1x16x128xbf16>
    %25 = vector.shape_cast %24 : vector<1x16x128xbf16> to vector<16x128xbf16>
    %cst_11 = arith.constant dense<0.000000e+00> : vector<16x128xf32>
    %26 = tpu.matmul %2, %25, %cst_11 {dimension_numbers = #tpu.dot_dimension_numbers<[1], [0], [0], [1], [0, 0, 1, 1], [], []>} : vector<16x16xbf16>, vector<16x128xbf16>, vector<16x128xf32> -> vector<16x128xf32>
    %27 = tpu.concatenate %5, %8, %11, %14, %17, %20, %23, %26 in 0 : vector<16x128xf32>, vector<16x128xf32>, vector<16x128xf32>, vector<16x128xf32>, vector<16x128xf32>, vector<16x128xf32>, vector<16x128xf32>, vector<16x128xf32> -> vector<128x128xf32>
    %28 = arith.truncf %27 : vector<128x128xf32> to vector<128x128xbf16>
    %c0_12 = arith.constant 0 : index
    %c0_13 = arith.constant 0 : index
    %29 = vector.load %arg5[%c0_12, %c0_13] : memref<128x512xbf16, #tpu.memory_space<vmem>>, vector<128x512xbf16>
    %cst_14 = arith.constant dense<0.000000e+00> : vector<128x512xf32>
    %30 = tpu.matmul %28, %29, %cst_14 {dimension_numbers = #tpu.dot_dimension_numbers<[1], [0], [0], [1], [0, 0, 1, 1], [], []>} : vector<128x128xbf16>, vector<128x512xbf16>, vector<128x512xf32> -> vector<128x512xf32>
    %c0_15 = arith.constant 0 : index
    %c0_16 = arith.constant 0 : index
    %31 = vector.load %arg6[%c0_15, %c0_16] : memref<1x512xf32, #tpu.memory_space<vmem>>, vector<1x512xf32>
    %32 = vector.broadcast %31 : vector<1x512xf32> to vector<128x512xf32>
    %33 = arith.addf %30, %32 : vector<128x512xf32>
    %34 = vector.extract_strided_slice %33 {offsets = [0, 0], sizes = [128, 256], strides = [1, 1]} : vector<128x512xf32> to vector<128x256xf32>
    %35 = arith.negf %34 : vector<128x256xf32>
    %36 = math.exp %35 : vector<128x256xf32>
    %cst_17 = arith.constant 1.000000e+00 : f32
    %37 = vector.broadcast %cst_17 : f32 to vector<128x256xf32>
    %38 = arith.addf %37, %36 : vector<128x256xf32>
    %39 = arith.divf %37, %38 : vector<128x256xf32>
    %40 = vector.extract_strided_slice %33 {offsets = [0, 256], sizes = [128, 256], strides = [1, 1]} : vector<128x512xf32> to vector<128x256xf32>
    %41 = math.tanh %40 : vector<128x256xf32>
    %cst_18 = arith.constant 1.000000e+00 : f32
    %42 = vector.broadcast %cst_18 : f32 to vector<128x256xf32>
    %43 = arith.subf %42, %39 : vector<128x256xf32>
    %44 = arith.mulf %43, %41 : vector<128x256xf32>
    %45 = vector.shape_cast %44 : vector<128x256xf32> to vector<8x16x256xf32>
    %c0_19 = arith.constant 0 : index
    %46 = memref.load %arg1[%c0_19] : memref<8xf32, #tpu.memory_space<smem>>
    %47 = vector.extract_strided_slice %45 {offsets = [0, 0, 0], sizes = [1, 16, 256], strides = [1, 1, 1]} : vector<8x16x256xf32> to vector<1x16x256xf32>
    %48 = vector.shape_cast %47 : vector<1x16x256xf32> to vector<16x256xf32>
    %49 = vector.broadcast %46 : f32 to vector<16x256xf32>
    %50 = arith.mulf %49, %48 : vector<16x256xf32>
    %c1 = arith.constant 1 : index
    %51 = memref.load %arg1[%c1] : memref<8xf32, #tpu.memory_space<smem>>
    %52 = vector.extract_strided_slice %45 {offsets = [1, 0, 0], sizes = [1, 16, 256], strides = [1, 1, 1]} : vector<8x16x256xf32> to vector<1x16x256xf32>
    %53 = vector.shape_cast %52 : vector<1x16x256xf32> to vector<16x256xf32>
    %54 = vector.broadcast %51 : f32 to vector<16x256xf32>
    %55 = arith.mulf %54, %53 : vector<16x256xf32>
    %56 = arith.addf %50, %55 : vector<16x256xf32>
    %c2 = arith.constant 2 : index
    %57 = memref.load %arg1[%c2] : memref<8xf32, #tpu.memory_space<smem>>
    %58 = vector.extract_strided_slice %45 {offsets = [2, 0, 0], sizes = [1, 16, 256], strides = [1, 1, 1]} : vector<8x16x256xf32> to vector<1x16x256xf32>
    %59 = vector.shape_cast %58 : vector<1x16x256xf32> to vector<16x256xf32>
    %60 = vector.broadcast %57 : f32 to vector<16x256xf32>
    %61 = arith.mulf %60, %59 : vector<16x256xf32>
    %62 = arith.addf %56, %61 : vector<16x256xf32>
    %c3 = arith.constant 3 : index
    %63 = memref.load %arg1[%c3] : memref<8xf32, #tpu.memory_space<smem>>
    %64 = vector.extract_strided_slice %45 {offsets = [3, 0, 0], sizes = [1, 16, 256], strides = [1, 1, 1]} : vector<8x16x256xf32> to vector<1x16x256xf32>
    %65 = vector.shape_cast %64 : vector<1x16x256xf32> to vector<16x256xf32>
    %66 = vector.broadcast %63 : f32 to vector<16x256xf32>
    %67 = arith.mulf %66, %65 : vector<16x256xf32>
    %68 = arith.addf %62, %67 : vector<16x256xf32>
    %c4 = arith.constant 4 : index
    %69 = memref.load %arg1[%c4] : memref<8xf32, #tpu.memory_space<smem>>
    %70 = vector.extract_strided_slice %45 {offsets = [4, 0, 0], sizes = [1, 16, 256], strides = [1, 1, 1]} : vector<8x16x256xf32> to vector<1x16x256xf32>
    %71 = vector.shape_cast %70 : vector<1x16x256xf32> to vector<16x256xf32>
    %72 = vector.broadcast %69 : f32 to vector<16x256xf32>
    %73 = arith.mulf %72, %71 : vector<16x256xf32>
    %74 = arith.addf %68, %73 : vector<16x256xf32>
    %c5 = arith.constant 5 : index
    %75 = memref.load %arg1[%c5] : memref<8xf32, #tpu.memory_space<smem>>
    %76 = vector.extract_strided_slice %45 {offsets = [5, 0, 0], sizes = [1, 16, 256], strides = [1, 1, 1]} : vector<8x16x256xf32> to vector<1x16x256xf32>
    %77 = vector.shape_cast %76 : vector<1x16x256xf32> to vector<16x256xf32>
    %78 = vector.broadcast %75 : f32 to vector<16x256xf32>
    %79 = arith.mulf %78, %77 : vector<16x256xf32>
    %80 = arith.addf %74, %79 : vector<16x256xf32>
    %c6 = arith.constant 6 : index
    %81 = memref.load %arg1[%c6] : memref<8xf32, #tpu.memory_space<smem>>
    %82 = vector.extract_strided_slice %45 {offsets = [6, 0, 0], sizes = [1, 16, 256], strides = [1, 1, 1]} : vector<8x16x256xf32> to vector<1x16x256xf32>
    %83 = vector.shape_cast %82 : vector<1x16x256xf32> to vector<16x256xf32>
    %84 = vector.broadcast %81 : f32 to vector<16x256xf32>
    %85 = arith.mulf %84, %83 : vector<16x256xf32>
    %86 = arith.addf %80, %85 : vector<16x256xf32>
    %c7 = arith.constant 7 : index
    %87 = memref.load %arg1[%c7] : memref<8xf32, #tpu.memory_space<smem>>
    %88 = vector.extract_strided_slice %45 {offsets = [7, 0, 0], sizes = [1, 16, 256], strides = [1, 1, 1]} : vector<8x16x256xf32> to vector<1x16x256xf32>
    %89 = vector.shape_cast %88 : vector<1x16x256xf32> to vector<16x256xf32>
    %90 = vector.broadcast %87 : f32 to vector<16x256xf32>
    %91 = arith.mulf %90, %89 : vector<16x256xf32>
    %92 = arith.addf %86, %91 : vector<16x256xf32>
    %cst_20 = arith.constant 0.000000e+00 : f32
    %93 = vector.broadcast %cst_20 : f32 to vector<16x256xf32>
    %94 = arith.maximumf %92, %93 : vector<16x256xf32>
    %c0_21 = arith.constant 0 : index
    %c0_22 = arith.constant 0 : index
    %95 = vector.load %arg7[%c0_21, %c0_22] : memref<1x256xf32, #tpu.memory_space<vmem>>, vector<1x256xf32>
    %96 = vector.broadcast %95 : vector<1x256xf32> to vector<16x256xf32>
    %97 = arith.mulf %94, %96 : vector<16x256xf32>
    %cst_23 = arith.constant dense<0.000000e+00> : vector<16xf32>
    %98 = vector.multi_reduction <add>, %97, %cst_23 [1] : vector<16x256xf32> to vector<16xf32>
    %c0_24 = arith.constant 0 : index
    %99 = memref.load %arg2[%c0_24] : memref<1xf32, #tpu.memory_space<smem>>
    %100 = vector.broadcast %99 : f32 to vector<16xf32>
    %101 = arith.addf %98, %100 : vector<16xf32>
    %102 = vector.shape_cast %101 : vector<16xf32> to vector<1x1x16xf32>
    %c0_25 = arith.constant 0 : index
    %c0_26 = arith.constant 0 : index
    %c0_27 = arith.constant 0 : index
    %103 = vector.load %arg8[%c0_25, %c0_26, %c0_27] : memref<1x1x16xf32, #tpu.memory_space<vmem>>, vector<1x1x16xf32>
    tpu.vector_store %arg8[%c0_25, %c0_26, %c0_27], %102 {strides = array<i32>} : memref<1x1x16xf32, #tpu.memory_space<vmem>>, vector<1x1x16xf32>,
    return
  }
  func.func @transform_0(%arg0: i32) -> i32 {
    %c0_i32 = arith.constant 0 : i32
    %c0_i32_0 = arith.constant 0 : i32
    return %c0_i32 : i32
  }
  func.func @transform_1(%arg0: i32) -> i32 {
    %c0_i32 = arith.constant 0 : i32
    %c0_i32_0 = arith.constant 0 : i32
    return %c0_i32 : i32
  }
  func.func @transform_2(%arg0: i32) -> (i32, i32, i32, i32) {
    %c0_i32 = arith.constant 0 : i32
    %c0_i32_0 = arith.constant 0 : i32
    %c0_i32_1 = arith.constant 0 : i32
    %c0_i32_2 = arith.constant 0 : i32
    return %arg0, %c0_i32, %c0_i32_0, %c0_i32_1 : i32, i32, i32, i32
  }
  func.func @transform_3(%arg0: i32) -> (i32, i32) {
    %c0_i32 = arith.constant 0 : i32
    %c0_i32_0 = arith.constant 0 : i32
    %c0_i32_1 = arith.constant 0 : i32
    return %c0_i32, %c0_i32_0 : i32, i32
  }
  func.func @transform_4(%arg0: i32) -> (i32, i32) {
    %c0_i32 = arith.constant 0 : i32
    %c0_i32_0 = arith.constant 0 : i32
    %c0_i32_1 = arith.constant 0 : i32
    return %c0_i32, %c0_i32_0 : i32, i32
  }
  func.func @transform_5(%arg0: i32) -> (i32, i32) {
    %c0_i32 = arith.constant 0 : i32
    %c0_i32_0 = arith.constant 0 : i32
    %c0_i32_1 = arith.constant 0 : i32
    return %c0_i32, %c0_i32_0 : i32, i32
  }
  func.func @transform_6(%arg0: i32) -> (i32, i32) {
    %c0_i32 = arith.constant 0 : i32
    %c0_i32_0 = arith.constant 0 : i32
    %c0_i32_1 = arith.constant 0 : i32
    return %c0_i32, %c0_i32_0 : i32, i32
  }
  func.func @transform_7(%arg0: i32) -> (i32, i32, i32) {
    %c0_i32 = arith.constant 0 : i32
    %c0_i32_0 = arith.constant 0 : i32
    %c0_i32_1 = arith.constant 0 : i32
    return %arg0, %c0_i32, %c0_i32_0 : i32, i32, i32
  }
}

</mosaic_0001>

<llo_original>
// kernel: tpu_custom_call.1
$region0: #{tpu_custom_call.1}
  #allocation0 [shape = 'u32[]', space=smem, size = 0x4, offset = 0x4, fixed_abs, tag = 'smem constant byte address 0x4 - core index']
  #allocation1 [shape = 'u32[144,128]{1,0:T(1,128)}', space=vmem, size = 0x12000, scoped, tag = 'internal scratch']
  #allocation2 [shape = 'f32[1]{0:T(128)S(6)}', space=smem, size = 0x200, scoped, tag = 'scoped memory for tpu_custom_call.1']
  %s0 = inlined_call_operand.vmem [shape: f32[8], index: 0, kind: input, shape index: {}]
  %s1 = inlined_call_operand.<no memory space> [shape: f32[1], index: 1, kind: input, shape index: {}]
  %s2 = inlined_call_operand.hbm [shape: bf16[2,8,16,128], index: 2, kind: input, shape index: {}]
  %s3 = inlined_call_operand.vmem [shape: bf16[16,16], index: 3, kind: input, shape index: {}]
  %s4 = inlined_call_operand.hbm [shape: bf16[128,512], index: 4, kind: input, shape index: {}]
  %s5 = inlined_call_operand.vmem [shape: f32[1,512], index: 5, kind: input, shape index: {}]
  %s6 = inlined_call_operand.vmem [shape: f32[1,256], index: 6, kind: input, shape index: {}]
  %s7 = inlined_call_operand.hbm [shape: f32[2,1,16], index: 7, kind: output, shape index: {}]
  %s8 = sld [smem:[#allocation0]]
  $region73: #{tpu_custom_call.1} parent=0
    _
  %s10 = ssub.s32 1, %s8
  %s11 = scalar_select 0, %s10, %s8
  %12 = sst [smem:[#allocation2]] %s1
  $region1: #{tpu_custom_call.1} parent=0
    #allocation3 [shape = 'u8[512]{0}', space=smem, size = 0x200, scoped, tag = 'input window, operand 0, single buffered']
    #allocation4 [shape = 's32[2]{0}', space=sflag, size = 0x8, scoped, tag = 'scoped memory for tpu_custom_call.1']
    #allocation5 [shape = 's32[2]{0}', space=sflag, size = 0x8, scoped, tag = 'scoped memory for tpu_custom_call.1']
    #allocation6 [shape = 's32[2]{0}', space=sflag, size = 0x8, scoped, tag = 'scoped memory for tpu_custom_call.1']
    #allocation7 [shape = 'u8[65536]{0}', space=vmem, size = 0x10000, scoped, tag = 'input window, operand 2']
    #allocation8 [shape = 'u8[131072]{0}', space=vmem, size = 0x20000, scoped, tag = 'input window, operand 4, single buffered']
    #allocation9 [shape = 's32[1]{0}', space=sflag, size = 0x4, scoped, tag = 'scoped memory for tpu_custom_call.1']
    #allocation10 [shape = 'u8[1024]{0}', space=vmem, size = 0x400, scoped, tag = 'output window, operand 0']
    %13 = vsyncpa [#allocation6], 0
    %14 = vsyncpa [#allocation4], 0
    %s15 = scalar_lea.sflag [#allocation4], 1
    %16 = vsyncpa %s15, 0
    %17 = vsyncpa [#allocation9], 0
    %18 = vsyncpa [#allocation5], 0
    %s19 = scalar_lea.sflag [#allocation5], 1
    %20 = vsyncpa %s19, 0
    loop: start=0, step=1, limit=4
    $region2: #{tpu_custom_call.1} parent=1 // loop_pre_header
      _
    $region3: #{tpu_custom_call.1} parent=1 // loop_header
      %s22 = sphi 0, %s26
      %p23 = scmp.ge.s32.totalorder %s22, 4
      %s30 = sphi 0, %s30
      %s32 = sphi 0, %s30
      %s33 = sphi 0, %s32
      %s47 = sphi 0, %s33
      %s51 = sphi 0, %s51
      %s53 = sphi 0, %s51
      %s54 = sphi 0, %s53
      %s68 = sphi 0, %s54
      %s74 = sphi 0, %s76
      %s77 = sphi 0, %s74
      %s78 = sphi 0, %s77
      %s94 = sphi 0, %s78
      %s98 = sphi 0, %s98
      %s100 = sphi 0, %s98
      %s101 = sphi 0, %s100
      %s115 = sphi 0, %s101
      %s119 = sphi 0, %s119
      %s121 = sphi 0, %s119
      %s122 = sphi 0, %s121
      %s136 = sphi 0, %s122
      %s140 = sphi 0, %s140
      %s142 = sphi 0, %s140
      %s143 = sphi 0, %s142
      %s157 = sphi 0, %s143
      %s161 = sphi 0, %s161
      %s163 = sphi 0, %s161
      %s164 = sphi 0, %s163
      %s178 = sphi 0, %s164
      %s184 = sphi 0, %s186
      %s187 = sphi 0, %s184
      %s188 = sphi 0, %s187
      %s204 = sphi 0, %s188
    $region4: #{tpu_custom_call.1} parent=1 // loop_header_branch
      %25 = sbr.rel (%p23) target = $region8
    $region5: #{tpu_custom_call.1} parent=1 // loop_body
      %s27 = ssub.s32 %s22, 1
      %s28 = ssub.s32 %s22, 2
      %s29 = sadd.s32 %s22, 1
      %s31 = sadd.s32 %s30, 1
      %p34 = scmp.eq.s32.totalorder %s22, 1
      %p35 = scmp.ne.s32.totalorder %s30, %s32
      %p36 = scmp.eq.s32.totalorder %s22, 0
      %p37 = por %p35, %p36
      %p38 = scmp.ne.s32.totalorder %s30, %s32
      %p39 = scmp.eq.s32.totalorder %s27, 1
      %p40 = por %p38, %p39
      %p41 = scmp.ne.s32.totalorder %s32, %s33
      %p42 = scmp.eq.s32.totalorder %s27, 0
      %p43 = por %p41, %p42
      %p44 = scmp.ne.s32.totalorder %s32, %s33
      %p45 = scmp.eq.s32.totalorder %s28, 1
      %p46 = por %p44, %p45
      %p48 = scmp.ne.s32.totalorder %s33, %s47
      %p49 = scmp.eq.s32.totalorder %s28, 0
      %p50 = por %p48, %p49
      %s52 = sadd.s32 %s51, 1
      %p55 = scmp.eq.s32.totalorder %s22, 1
      %p56 = scmp.ne.s32.totalorder %s51, %s53
      %p57 = scmp.eq.s32.totalorder %s22, 0
      %p58 = por %p56, %p57
      %p59 = scmp.ne.s32.totalorder %s51, %s53
      %p60 = scmp.eq.s32.totalorder %s27, 1
      %p61 = por %p59, %p60
      %p62 = scmp.ne.s32.totalorder %s53, %s54
      %p63 = scmp.eq.s32.totalorder %s27, 0
      %p64 = por %p62, %p63
      %p65 = scmp.ne.s32.totalorder %s53, %s54
      %p66 = scmp.eq.s32.totalorder %s28, 1
      %p67 = por %p65, %p66
      %p69 = scmp.ne.s32.totalorder %s54, %s68
      %p70 = scmp.eq.s32.totalorder %s28, 0
      %p71 = por %p69, %p70
      %s72 = ssub.s32 %s22, %s29
      %p73 = scmp.eq.s32.totalorder %s72, 0
      %s75 = sadd.s32 %s74, 1
      %s76 = scalar_select %p73, %s74, %s75
      %p79 = pneg %p73
      %p80 = scmp.eq.s32.totalorder %s22, 1
      %p81 = por %p79, %p80
      %p82 = scmp.ne.s32.totalorder %s74, %s77
      %p83 = scmp.eq.s32.totalorder %s22, 0
      %p84 = por %p82, %p83
      %p85 = scmp.ne.s32.totalorder %s74, %s77
      %p86 = scmp.eq.s32.totalorder %s27, 1
      %p87 = por %p85, %p86
      %p88 = scmp.ne.s32.totalorder %s77, %s78
      %p89 = scmp.eq.s32.totalorder %s27, 0
      %p90 = por %p88, %p89
      %p91 = scmp.ne.s32.totalorder %s77, %s78
      %p92 = scmp.eq.s32.totalorder %s28, 1
      %p93 = por %p91, %p92
      %p95 = scmp.ne.s32.totalorder %s78, %s94
      %p96 = scmp.eq.s32.totalorder %s28, 0
      %p97 = por %p95, %p96
      %s99 = sadd.s32 %s98, 1
      %p102 = scmp.eq.s32.totalorder %s22, 1
      %p103 = scmp.ne.s32.totalorder %s98, %s100
      %p104 = scmp.eq.s32.totalorder %s22, 0
      %p105 = por %p103, %p104
      %p106 = scmp.ne.s32.totalorder %s98, %s100
      %p107 = scmp.eq.s32.totalorder %s27, 1
      %p108 = por %p106, %p107
      %p109 = scmp.ne.s32.totalorder %s100, %s101
      %p110 = scmp.eq.s32.totalorder %s27, 0
      %p111 = por %p109, %p110
      %p112 = scmp.ne.s32.totalorder %s100, %s101
      %p113 = scmp.eq.s32.totalorder %s28, 1
      %p114 = por %p112, %p113
      %p116 = scmp.ne.s32.totalorder %s101, %s115
      %p117 = scmp.eq.s32.totalorder %s28, 0
      %p118 = por %p116, %p117
      %s120 = sadd.s32 %s119, 1
      %p123 = scmp.eq.s32.totalorder %s22, 1
      %p124 = scmp.ne.s32.totalorder %s119, %s121
      %p125 = scmp.eq.s32.totalorder %s22, 0
      %p126 = por %p124, %p125
      %p127 = scmp.ne.s32.totalorder %s119, %s121
      %p128 = scmp.eq.s32.totalorder %s27, 1
      %p129 = por %p127, %p128
      %p130 = scmp.ne.s32.totalorder %s121, %s122
      %p131 = scmp.eq.s32.totalorder %s27, 0
      %p132 = por %p130, %p131
      %p133 = scmp.ne.s32.totalorder %s121, %s122
      %p134 = scmp.eq.s32.totalorder %s28, 1
      %p135 = por %p133, %p134
      %p137 = scmp.ne.s32.totalorder %s122, %s136
      %p138 = scmp.eq.s32.totalorder %s28, 0
      %p139 = por %p137, %p138
      %s141 = sadd.s32 %s140, 1
      %p144 = scmp.eq.s32.totalorder %s22, 1
      %p145 = scmp.ne.s32.totalorder %s140, %s142
      %p146 = scmp.eq.s32.totalorder %s22, 0
      %p147 = por %p145, %p146
      %p148 = scmp.ne.s32.totalorder %s140, %s142
      %p149 = scmp.eq.s32.totalorder %s27, 1
      %p150 = por %p148, %p149
      %p151 = scmp.ne.s32.totalorder %s142, %s143
      %p152 = scmp.eq.s32.totalorder %s27, 0
      %p153 = por %p151, %p152
      %p154 = scmp.ne.s32.totalorder %s142, %s143
      %p155 = scmp.eq.s32.totalorder %s28, 1
      %p156 = por %p154, %p155
      %p158 = scmp.ne.s32.totalorder %s143, %s157
      %p159 = scmp.eq.s32.totalorder %s28, 0
      %p160 = por %p158, %p159
      %s162 = sadd.s32 %s161, 1
      %p165 = scmp.eq.s32.totalorder %s22, 1
      %p166 = scmp.ne.s32.totalorder %s161, %s163
      %p167 = scmp.eq.s32.totalorder %s22, 0
      %p168 = por %p166, %p167
      %p169 = scmp.ne.s32.totalorder %s161, %s163
      %p170 = scmp.eq.s32.totalorder %s27, 1
      %p171 = por %p169, %p170
      %p172 = scmp.ne.s32.totalorder %s163, %s164
      %p173 = scmp.eq.s32.totalorder %s27, 0
      %p174 = por %p172, %p173
      %p175 = scmp.ne.s32.totalorder %s163, %s164
      %p176 = scmp.eq.s32.totalorder %s28, 1
      %p177 = por %p175, %p176
      %p179 = scmp.ne.s32.totalorder %s164, %s178
      %p180 = scmp.eq.s32.totalorder %s28, 0
      %p181 = por %p179, %p180
      %s182 = ssub.s32 %s22, %s29
      %p183 = scmp.eq.s32.totalorder %s182, 0
      %s185 = sadd.s32 %s184, 1
      %s186 = scalar_select %p183, %s184, %s185
      %p189 = pneg %p183
      %p190 = scmp.eq.s32.totalorder %s22, 1
      %p191 = por %p189, %p190
      %p192 = scmp.ne.s32.totalorder %s184, %s187
      %p193 = scmp.eq.s32.totalorder %s22, 0
      %p194 = por %p192, %p193
      %p195 = scmp.ne.s32.totalorder %s184, %s187
      %p196 = scmp.eq.s32.totalorder %s27, 1
      %p197 = por %p195, %p196
      %p198 = scmp.ne.s32.totalorder %s187, %s188
      %p199 = scmp.eq.s32.totalorder %s27, 0
      %p200 = por %p198, %p199
      %p201 = scmp.ne.s32.totalorder %s187, %s188
      %p202 = scmp.eq.s32.totalorder %s28, 1
      %p203 = por %p201, %p202
      %p205 = scmp.ne.s32.totalorder %s188, %s204
      %p206 = scmp.eq.s32.totalorder %s28, 0
      %p207 = por %p205, %p206
      %p208 = scmp.le.s32.totalorder 1, %s22
      %p209 = scmp.lt.s32.totalorder %s22, 3
      %p210 = pnand %p208, %p209
      %p211 = pneg %p210
      // Predicated region
      $region9: #{tpu_custom_call.1} parent=5 // pred_check
        _
      $region10: #{tpu_custom_call.1} parent=5 // pred_check_branch
        %213 = sbr.rel (%p210) target = $region12
      $region11: #{tpu_custom_call.1} parent=5 // pred_region
        %s214 = ssub.s32 %s22, 1
        // Predicated region
        $region13: #{tpu_custom_call.1} parent=11 // pred_check
          %p215 = pneg %p43
        $region14: #{tpu_custom_call.1} parent=11 // pred_check_branch
          %217 = sbr.rel (%p215) target = $region16
        $region15: #{tpu_custom_call.1} parent=11 // pred_region
          %s219 = ssub.s32 16, 16
          %220 = vsyncadd [#allocation6], %s219
          %s222 = sshll.u32 %s0, 4
          %s223 = int_to_ptr.vmem [resolvable:$true] %s222
          %225 = dma.vmem_to_smem %s223, 16, [#allocation3], [#allocation6]
        $region16: #{tpu_custom_call.1} parent=11 // pred_fallthru
          _
        // Predicated region
        $region17: #{tpu_custom_call.1} parent=11 // pred_check
          %p226 = pneg %p64
        $region18: #{tpu_custom_call.1} parent=11 // pred_check_branch
          %228 = sbr.rel (%p226) target = $region20
        $region19: #{tpu_custom_call.1} parent=11 // pred_region
          _
        $region20: #{tpu_custom_call.1} parent=11 // pred_fallthru
          _
        // Predicated region
        $region21: #{tpu_custom_call.1} parent=11 // pred_check
          %p229 = pneg %p111
        $region22: #{tpu_custom_call.1} parent=11 // pred_check_branch
          %231 = sbr.rel (%p229) target = $region24
        $region23: #{tpu_custom_call.1} parent=11 // pred_region
          _
        $region24: #{tpu_custom_call.1} parent=11 // pred_fallthru
          _
        // Predicated region
        $region25: #{tpu_custom_call.1} parent=11 // pred_check
          %p232 = pneg %p132
        $region26: #{tpu_custom_call.1} parent=11 // pred_check_branch
          %234 = sbr.rel (%p232) target = $region28
        $region27: #{tpu_custom_call.1} parent=11 // pred_region
          %s236 = ssub.s32 4096, 4096
          %237 = vsyncadd [#allocation9], %s236
          %s238 = sshll.u32 [#allocation8], 4
          %s239 = int_to_ptr.vmem [resolvable:$true] %s238
          %244 = dma.hbm_to_vmem [thread:$0]  %s4, 4096, %s239, [#allocation9], 256, 256, 16
        $region28: #{tpu_custom_call.1} parent=11 // pred_fallthru
          _
        // Predicated region
        $region29: #{tpu_custom_call.1} parent=11 // pred_check
          %p245 = pneg %p153
        $region30: #{tpu_custom_call.1} parent=11 // pred_check_branch
          %247 = sbr.rel (%p245) target = $region32
        $region31: #{tpu_custom_call.1} parent=11 // pred_region
          _
        $region32: #{tpu_custom_call.1} parent=11 // pred_fallthru
          _
        // Predicated region
        $region33: #{tpu_custom_call.1} parent=11 // pred_check
          %p248 = pneg %p174
        $region34: #{tpu_custom_call.1} parent=11 // pred_check_branch
          %250 = sbr.rel (%p248) target = $region36
        $region35: #{tpu_custom_call.1} parent=11 // pred_region
          _
        $region36: #{tpu_custom_call.1} parent=11 // pred_fallthru
          _
      $region12: #{tpu_custom_call.1} parent=5 // pred_fallthru
        _
      %p251 = scmp.lt.s32.totalorder %s22, 2
      // Predicated region
      $region37: #{tpu_custom_call.1} parent=5 // pred_check
        %p252 = pneg %p251
      $region38: #{tpu_custom_call.1} parent=5 // pred_check_branch
        %254 = sbr.rel (%p252) target = $region40
      $region39: #{tpu_custom_call.1} parent=5 // pred_region
        // Predicated region
        $region41: #{tpu_custom_call.1} parent=39 // pred_check
          %p255 = pneg %p84
        $region42: #{tpu_custom_call.1} parent=39 // pred_check_branch
          %257 = sbr.rel (%p255) target = $region44
        $region43: #{tpu_custom_call.1} parent=39 // pred_region
          %s258 = sand.u32 %s74, 1
          %s259 = scalar_lea.sflag [#allocation4], %s258
          %s260 = sand.u32 %s74, 1
          %s261 = smul.addr %s260, 64
          %s262 = scalar_lea.vmem [#allocation7], %s261
          %s264 = ssub.s32 1024, 1024
          %265 = vsyncadd %s259, %s264
          %s266 = smul.addr %s22, 16
          %s267 = smul.addr %s266, 64
          %s268 = scalar_lea.hbm %s2, %s267
          %s269 = sshll.u32 %s262, 4
          %s270 = int_to_ptr.vmem [resolvable:$true] %s269
          %275 = dma.hbm_to_vmem [thread:$0]  %s268, 1024, %s270, %s259, 64, 64, 4
        $region44: #{tpu_custom_call.1} parent=39 // pred_fallthru
          _
      $region40: #{tpu_custom_call.1} parent=5 // pred_fallthru
        _
      %p276 = scmp.le.s32.totalorder 1, %s22
      %p277 = scmp.lt.s32.totalorder %s22, 3
      %p278 = pnand %p276, %p277
      %p279 = pneg %p278
      // Predicated region
      $region45: #{tpu_custom_call.1} parent=5 // pred_check
        _
      $region46: #{tpu_custom_call.1} parent=5 // pred_check_branch
        %281 = sbr.rel (%p278) target = $region48
      $region47: #{tpu_custom_call.1} parent=5 // pred_region
        %s282 = ssub.s32 %s22, 1
        // Predicated region
        $region49: #{tpu_custom_call.1} parent=47 // pred_check
          %p283 = pneg %p43
        $region50: #{tpu_custom_call.1} parent=47 // pred_check_branch
          %285 = sbr.rel (%p283) target = $region52
        $region51: #{tpu_custom_call.1} parent=47 // pred_region
          %286 = dma.done [#allocation6], 16
        $region52: #{tpu_custom_call.1} parent=47 // pred_fallthru
          _
        %s287 = sand.u32 %s77, 1
        %s288 = scalar_lea.sflag [#allocation4], %s287
        %s289 = sand.u32 %s77, 1
        %s290 = smul.addr %s289, 64
        %s291 = scalar_lea.vmem [#allocation7], %s290
        // Predicated region
        $region53: #{tpu_custom_call.1} parent=47 // pred_check
          %p292 = pneg %p90
        $region54: #{tpu_custom_call.1} parent=47 // pred_check_branch
          %294 = sbr.rel (%p292) target = $region56
        $region55: #{tpu_custom_call.1} parent=47 // pred_region
          %295 = dma.done %s288, 1024
        $region56: #{tpu_custom_call.1} parent=47 // pred_fallthru
          _
        // Predicated region
        $region57: #{tpu_custom_call.1} parent=47 // pred_check
          %p296 = pneg %p132
        $region58: #{tpu_custom_call.1} parent=47 // pred_check_branch
          %298 = sbr.rel (%p296) target = $region60
        $region59: #{tpu_custom_call.1} parent=47 // pred_region
          %299 = dma.done [#allocation9], 4096
        $region60: #{tpu_custom_call.1} parent=47 // pred_fallthru
          _
        %300 = sfence
        %p301 = pneg %p43
        %p302 = pneg %p40
        %p303 = pneg %p64
        %p304 = pneg %p61
        %s305 = sand.u32 %s77, 1
        %s306 = scalar_lea.sflag [#allocation4], %s305
        %s307 = sand.u32 %s77, 1
        %s308 = smul.addr %s307, 64
        %s309 = scalar_lea.vmem [#allocation7], %s308
        %p310 = pneg %p90
        %p311 = pneg %p87
        %p312 = pneg %p111
        %p313 = pneg %p108
        %p314 = pneg %p132
        %p315 = pneg %p129
        %p316 = pneg %p153
        %p317 = pneg %p150
        %p318 = pneg %p174
        %p319 = pneg %p171
        %p320 = pneg %p200
        %p321 = pneg %p197
        %s322 = sand.u32 %s187, 1
        %s323 = scalar_lea.sflag [#allocation5], %s322
        %s324 = sand.u32 %s187, 1
        %s325 = scalar_lea.vmem [#allocation10], %s324
        %v327 = vld [vmem:[%s291] sm:$0xf]
        %v328 = vld [vmem:[%s291 + $0x4] sm:$0xf]
        %v329 = vld [vmem:[%s291 + $0x8] sm:$0xf]
        %v330 = vld [vmem:[%s291 + $0xc] sm:$0xf]
        %v331 = vld [vmem:[%s291 + $0x10] sm:$0xf]
        %v332 = vld [vmem:[%s291 + $0x14] sm:$0xf]
        %v333 = vld [vmem:[%s291 + $0x18] sm:$0xf]
        %v334 = vld [vmem:[%s291 + $0x1c] sm:$0xf]
        %v335 = vld [vmem:[%s291 + $0x20] sm:$0xf]
        %v336 = vld [vmem:[%s291 + $0x24] sm:$0xf]
        %v337 = vld [vmem:[%s291 + $0x28] sm:$0xf]
        %v338 = vld [vmem:[%s291 + $0x2c] sm:$0xf]
        %v339 = vld [vmem:[%s291 + $0x30] sm:$0xf]
        %v340 = vld [vmem:[%s291 + $0x34] sm:$0xf]
        %v341 = vld [vmem:[%s291 + $0x38] sm:$0xf]
        %v342 = vld [vmem:[%s291 + $0x3c] sm:$0xf]
        %v343 = vld [vmem:[%s3] sm:$0xf]
        %v344 = vld [vmem:[%s3 + $0x4] sm:$0xf]
        %v347 = vunpack.c.l.b16 %v343
        %v348 = vunpack.c.l.b16 %v344
        %v349 = vpack.c.b16 %v348, %v347
        %v352 = vunpack.c.l.b16 %v327
        %v353 = vunpack.c.l.b16 %v328
        %v354 = vpack.c.b16 %v353, %v352
        %vm356 = vcmask 130048
        %v358 = vsel %vm356, %v349, 0
        %360 = vmatprep.subr.bf16.mxu0 0
        %361 = vmatpush1.bf16.msra.mxu0 %v354
        %362 = vmatprep.subr.bf16.mxu0 0
        %363 = vmatpush1.bf16.msra.mxu0 0
        %364 = vmatprep.subr.bf16.mxu0 0
        %365 = vmatpush1.bf16.msra.mxu0 0
        %366 = vmatprep.subr.bf16.mxu0 0
        %367 = vmatpush1.bf16.msra.mxu0 0
        %368 = vmatprep.subr.bf16.mxu0 0
        %369 = vmatpush1.bf16.msra.mxu0 0
        %370 = vmatprep.subr.bf16.mxu0 0
        %371 = vmatpush1.bf16.msra.mxu0 0
        %372 = vmatprep.subr.bf16.mxu0 0
        %373 = vmatpush1.bf16.msra.mxu0 0
        %374 = vmatprep.subr.bf16.mxu0 0
        %375 = vmatpush1.bf16.msra.mxu0 0
        %376 = vmatprep.subr.bf16.mxu0 0
        %377 = vmatpush1.bf16.msra.mxu0 0
        %378 = vmatprep.subr.bf16.mxu0 0
        %379 = vmatpush1.bf16.msra.mxu0 0
        %380 = vmatprep.subr.bf16.mxu0 0
        %381 = vmatpush1.bf16.msra.mxu0 0
        %382 = vmatprep.subr.bf16.mxu0 0
        %383 = vmatpush1.bf16.msra.mxu0 0
        %384 = vmatprep.subr.bf16.mxu0 0
        %385 = vmatpush1.bf16.msra.mxu0 0
        %386 = vmatprep.subr.bf16.mxu0 0
        %387 = vmatpush1.bf16.msra.mxu0 0
        %388 = vmatprep.subr.bf16.mxu0 0
        %389 = vmatpush1.bf16.msra.mxu0 0
        %390 = vmatprep.subr.bf16.mxu0 0
        %391 = vmatpush1.bf16.msra.mxu0 0
        %392 = vmatprep.mubr.bf16.mxu0 0
        %393 = vmatmul.mubr.bf16.gmra.mrb[0].mxu0 %v358
        %v394 = vpop.f32.mrb[0].mxu0
        %v395 = vadd.f32 0.0, %v394
        %v396 = vpop.f32.mrb[0].mxu0
        %v397 = vpop.f32.mrb[0].mxu0
        %v398 = vadd.f32 0.0, %v397
        %v399 = vpop.f32.mrb[0].mxu0
        %400 = vdwg.mxu0
        %v403 = vunpack.c.l.b16 %v329
        %v404 = vunpack.c.l.b16 %v330
        %v405 = vpack.c.b16 %v404, %v403
        %407 = vmatprep.subr.bf16.mxu0 0
        %408 = vmatpush1.bf16.msra.mxu0 %v405
        %409 = vmatprep.subr.bf16.mxu0 0
        %410 = vmatpush1.bf16.msra.mxu0 0
        %411 = vmatprep.subr.bf16.mxu0 0
        %412 = vmatpush1.bf16.msra.mxu0 0
        %413 = vmatprep.subr.bf16.mxu0 0
        %414 = vmatpush1.bf16.msra.mxu0 0
        %415 = vmatprep.subr.bf16.mxu0 0
        %416 = vmatpush1.bf16.msra.mxu0 0
        %417 = vmatprep.subr.bf16.mxu0 0
        %418 = vmatpush1.bf16.msra.mxu0 0
        %419 = vmatprep.subr.bf16.mxu0 0
        %420 = vmatpush1.bf16.msra.mxu0 0
        %421 = vmatprep.subr.bf16.mxu0 0
        %422 = vmatpush1.bf16.msra.mxu0 0
        %423 = vmatprep.subr.bf16.mxu0 0
        %424 = vmatpush1.bf16.msra.mxu0 0
        %425 = vmatprep.subr.bf16.mxu0 0
        %426 = vmatpush1.bf16.msra.mxu0 0
        %427 = vmatprep.subr.bf16.mxu0 0
        %428 = vmatpush1.bf16.msra.mxu0 0
        %429 = vmatprep.subr.bf16.mxu0 0
        %430 = vmatpush1.bf16.msra.mxu0 0
        %431 = vmatprep.subr.bf16.mxu0 0
        %432 = vmatpush1.bf16.msra.mxu0 0
        %433 = vmatprep.subr.bf16.mxu0 0
        %434 = vmatpush1.bf16.msra.mxu0 0
        %435 = vmatprep.subr.bf16.mxu0 0
        %436 = vmatpush1.bf16.msra.mxu0 0
        %437 = vmatprep.subr.bf16.mxu0 0
        %438 = vmatpush1.bf16.msra.mxu0 0
        %439 = vmatprep.mubr.bf16.mxu0 0
        %440 = vmatmul.mubr.bf16.gmra.mrb[0].mxu0 %v358
        %v441 = vpop.f32.mrb[0].mxu0
        %v442 = vadd.f32 0.0, %v441
        %v443 = vpop.f32.mrb[0].mxu0
        %v444 = vpop.f32.mrb[0].mxu0
        %v445 = vadd.f32 0.0, %v444
        %v446 = vpop.f32.mrb[0].mxu0
        %447 = vdwg.mxu0
        %v450 = vunpack.c.l.b16 %v331
        %v451 = vunpack.c.l.b16 %v332
        %v452 = vpack.c.b16 %v451, %v450
        %454 = vmatprep.subr.bf16.mxu0 0
        %455 = vmatpush1.bf16.msra.mxu0 %v452
        %456 = vmatprep.subr.bf16.mxu0 0
        %457 = vmatpush1.bf16.msra.mxu0 0
        %458 = vmatprep.subr.bf16.mxu0 0
        %459 = vmatpush1.bf16.msra.mxu0 0
        %460 = vmatprep.subr.bf16.mxu0 0
        %461 = vmatpush1.bf16.msra.mxu0 0
        %462 = vmatprep.subr.bf16.mxu0 0
        %463 = vmatpush1.bf16.msra.mxu0 0
        %464 = vmatprep.subr.bf16.mxu0 0
        %465 = vmatpush1.bf16.msra.mxu0 0
        %466 = vmatprep.subr.bf16.mxu0 0
        %467 = vmatpush1.bf16.msra.mxu0 0
        %468 = vmatprep.subr.bf16.mxu0 0
        %469 = vmatpush1.bf16.msra.mxu0 0
        %470 = vmatprep.subr.bf16.mxu0 0
        %471 = vmatpush1.bf16.msra.mxu0 0
        %472 = vmatprep.subr.bf16.mxu0 0
        %473 = vmatpush1.bf16.msra.mxu0 0
        %474 = vmatprep.subr.bf16.mxu0 0
        %475 = vmatpush1.bf16.msra.mxu0 0
        %476 = vmatprep.subr.bf16.mxu0 0
        %477 = vmatpush1.bf16.msra.mxu0 0
        %478 = vmatprep.subr.bf16.mxu0 0
        %479 = vmatpush1.bf16.msra.mxu0 0
        %480 = vmatprep.subr.bf16.mxu0 0
        %481 = vmatpush1.bf16.msra.mxu0 0
        %482 = vmatprep.subr.bf16.mxu0 0
        %483 = vmatpush1.bf16.msra.mxu0 0
        %484 = vmatprep.subr.bf16.mxu0 0
        %485 = vmatpush1.bf16.msra.mxu0 0
        %486 = vmatprep.mubr.bf16.mxu0 0
        %487 = vmatmul.mubr.bf16.gmra.mrb[0].mxu0 %v358
        %v488 = vpop.f32.mrb[0].mxu0
        %v489 = vadd.f32 0.0, %v488
        %v490 = vpop.f32.mrb[0].mxu0
        %v491 = vpop.f32.mrb[0].mxu0
        %v492 = vadd.f32 0.0, %v491
        %v493 = vpop.f32.mrb[0].mxu0
        %494 = vdwg.mxu0
        %v497 = vunpack.c.l.b16 %v333
        %v498 = vunpack.c.l.b16 %v334
        %v499 = vpack.c.b16 %v498, %v497
        %501 = vmatprep.subr.bf16.mxu0 0
        %502 = vmatpush1.bf16.msra.mxu0 %v499
        %503 = vmatprep.subr.bf16.mxu0 0
        %504 = vmatpush1.bf16.msra.mxu0 0
        %505 = vmatprep.subr.bf16.mxu0 0
        %506 = vmatpush1.bf16.msra.mxu0 0
        %507 = vmatprep.subr.bf16.mxu0 0
        %508 = vmatpush1.bf16.msra.mxu0 0
        %509 = vmatprep.subr.bf16.mxu0 0
        %510 = vmatpush1.bf16.msra.mxu0 0
        %511 = vmatprep.subr.bf16.mxu0 0
        %512 = vmatpush1.bf16.msra.mxu0 0
        %513 = vmatprep.subr.bf16.mxu0 0
        %514 = vmatpush1.bf16.msra.mxu0 0
        %515 = vmatprep.subr.bf16.mxu0 0
        %516 = vmatpush1.bf16.msra.mxu0 0
        %517 = vmatprep.subr.bf16.mxu0 0
        %518 = vmatpush1.bf16.msra.mxu0 0
        %519 = vmatprep.subr.bf16.mxu0 0
        %520 = vmatpush1.bf16.msra.mxu0 0
        %521 = vmatprep.subr.bf16.mxu0 0
        %522 = vmatpush1.bf16.msra.mxu0 0
        %523 = vmatprep.subr.bf16.mxu0 0
        %524 = vmatpush1.bf16.msra.mxu0 0
        %525 = vmatprep.subr.bf16.mxu0 0
        %526 = vmatpush1.bf16.msra.mxu0 0
        %527 = vmatprep.subr.bf16.mxu0 0
        %528 = vmatpush1.bf16.msra.mxu0 0
        %529 = vmatprep.subr.bf16.mxu0 0
        %530 = vmatpush1.bf16.msra.mxu0 0
        %531 = vmatprep.subr.bf16.mxu0 0
        %532 = vmatpush1.bf16.msra.mxu0 0
        %533 = vmatprep.mubr.bf16.mxu0 0
        %534 = vmatmul.mubr.bf16.gmra.mrb[0].mxu0 %v358
        %v535 = vpop.f32.mrb[0].mxu0
        %v536 = vadd.f32 0.0, %v535
        %v537 = vpop.f32.mrb[0].mxu0
        %v538 = vpop.f32.mrb[0].mxu0
        %v539 = vadd.f32 0.0, %v538
        %v540 = vpop.f32.mrb[0].mxu0
        %541 = vdwg.mxu0
        %v544 = vunpack.c.l.b16 %v335
        %v545 = vunpack.c.l.b16 %v336
        %v546 = vpack.c.b16 %v545, %v544
        %548 = vmatprep.subr.bf16.mxu0 0
        %549 = vmatpush1.bf16.msra.mxu0 %v546
        %550 = vmatprep.subr.bf16.mxu0 0
        %551 = vmatpush1.bf16.msra.mxu0 0
        %552 = vmatprep.subr.bf16.mxu0 0
        %553 = vmatpush1.bf16.msra.mxu0 0
        %554 = vmatprep.subr.bf16.mxu0 0
        %555 = vmatpush1.bf16.msra.mxu0 0
        %556 = vmatprep.subr.bf16.mxu0 0
        %557 = vmatpush1.bf16.msra.mxu0 0
        %558 = vmatprep.subr.bf16.mxu0 0
        %559 = vmatpush1.bf16.msra.mxu0 0
        %560 = vmatprep.subr.bf16.mxu0 0
        %561 = vmatpush1.bf16.msra.mxu0 0
        %562 = vmatprep.subr.bf16.mxu0 0
        %563 = vmatpush1.bf16.msra.mxu0 0
        %564 = vmatprep.subr.bf16.mxu0 0
        %565 = vmatpush1.bf16.msra.mxu0 0
        %566 = vmatprep.subr.bf16.mxu0 0
        %567 = vmatpush1.bf16.msra.mxu0 0
        %568 = vmatprep.subr.bf16.mxu0 0
        %569 = vmatpush1.bf16.msra.mxu0 0
        %570 = vmatprep.subr.bf16.mxu0 0
        %571 = vmatpush1.bf16.msra.mxu0 0
        %572 = vmatprep.subr.bf16.mxu0 0
        %573 = vmatpush1.bf16.msra.mxu0 0
        %574 = vmatprep.subr.bf16.mxu0 0
        %575 = vmatpush1.bf16.msra.mxu0 0
        %576 = vmatprep.subr.bf16.mxu0 0
        %577 = vmatpush1.bf16.msra.mxu0 0
        %578 = vmatprep.subr.bf16.mxu0 0
        %579 = vmatpush1.bf16.msra.mxu0 0
        %580 = vmatprep.mubr.bf16.mxu0 0
        %581 = vmatmul.mubr.bf16.gmra.mrb[0].mxu0 %v358
        %v582 = vpop.f32.mrb[0].mxu0
        %v583 = vadd.f32 0.0, %v582
        %v584 = vpop.f32.mrb[0].mxu0
        %v585 = vpop.f32.mrb[0].mxu0
        %v586 = vadd.f32 0.0, %v585
        %v587 = vpop.f32.mrb[0].mxu0
        %588 = vdwg.mxu0
        %v591 = vunpack.c.l.b16 %v337
        %v592 = vunpack.c.l.b16 %v338
        %v593 = vpack.c.b16 %v592, %v591
        %595 = vmatprep.subr.bf16.mxu0 0
        %596 = vmatpush1.bf16.msra.mxu0 %v593
        %597 = vmatprep.subr.bf16.mxu0 0
        %598 = vmatpush1.bf16.msra.mxu0 0
        %599 = vmatprep.subr.bf16.mxu0 0
        %600 = vmatpush1.bf16.msra.mxu0 0
        %601 = vmatprep.subr.bf16.mxu0 0
        %602 = vmatpush1.bf16.msra.mxu0 0
        %603 = vmatprep.subr.bf16.mxu0 0
        %604 = vmatpush1.bf16.msra.mxu0 0
        %605 = vmatprep.subr.bf16.mxu0 0
        %606 = vmatpush1.bf16.msra.mxu0 0
        %607 = vmatprep.subr.bf16.mxu0 0
        %608 = vmatpush1.bf16.msra.mxu0 0
        %609 = vmatprep.subr.bf16.mxu0 0
        %610 = vmatpush1.bf16.msra.mxu0 0
        %611 = vmatprep.subr.bf16.mxu0 0
        %612 = vmatpush1.bf16.msra.mxu0 0
        %613 = vmatprep.subr.bf16.mxu0 0
        %614 = vmatpush1.bf16.msra.mxu0 0
        %615 = vmatprep.subr.bf16.mxu0 0
        %616 = vmatpush1.bf16.msra.mxu0 0
        %617 = vmatprep.subr.bf16.mxu0 0
        %618 = vmatpush1.bf16.msra.mxu0 0
        %619 = vmatprep.subr.bf16.mxu0 0
        %620 = vmatpush1.bf16.msra.mxu0 0
        %621 = vmatprep.subr.bf16.mxu0 0
        %622 = vmatpush1.bf16.msra.mxu0 0
        %623 = vmatprep.subr.bf16.mxu0 0
        %624 = vmatpush1.bf16.msra.mxu0 0
        %625 = vmatprep.subr.bf16.mxu0 0
        %626 = vmatpush1.bf16.msra.mxu0 0
        %627 = vmatprep.mubr.bf16.mxu0 0
        %628 = vmatmul.mubr.bf16.gmra.mrb[0].mxu0 %v358
        %v629 = vpop.f32.mrb[0].mxu0
        %v630 = vadd.f32 0.0, %v629
        %v631 = vpop.f32.mrb[0].mxu0
        %v632 = vpop.f32.mrb[0].mxu0
        %v633 = vadd.f32 0.0, %v632
        %v634 = vpop.f32.mrb[0].mxu0
        %635 = vdwg.mxu0
        %v638 = vunpack.c.l.b16 %v339
        %v639 = vunpack.c.l.b16 %v340
        %v640 = vpack.c.b16 %v639, %v638
        %642 = vmatprep.subr.bf16.mxu0 0
        %643 = vmatpush1.bf16.msra.mxu0 %v640
        %644 = vmatprep.subr.bf16.mxu0 0
        %645 = vmatpush1.bf16.msra.mxu0 0
        %646 = vmatprep.subr.bf16.mxu0 0
        %647 = vmatpush1.bf16.msra.mxu0 0
        %648 = vmatprep.subr.bf16.mxu0 0
        %649 = vmatpush1.bf16.msra.mxu0 0
        %650 = vmatprep.subr.bf16.mxu0 0
        %651 = vmatpush1.bf16.msra.mxu0 0
        %652 = vmatprep.subr.bf16.mxu0 0
        %653 = vmatpush1.bf16.msra.mxu0 0
        %654 = vmatprep.subr.bf16.mxu0 0
        %655 = vmatpush1.bf16.msra.mxu0 0
        %656 = vmatprep.subr.bf16.mxu0 0
        %657 = vmatpush1.bf16.msra.mxu0 0
        %658 = vmatprep.subr.bf16.mxu0 0
        %659 = vmatpush1.bf16.msra.mxu0 0
        %660 = vmatprep.subr.bf16.mxu0 0
        %661 = vmatpush1.bf16.msra.mxu0 0
        %662 = vmatprep.subr.bf16.mxu0 0
        %663 = vmatpush1.bf16.msra.mxu0 0
        %664 = vmatprep.subr.bf16.mxu0 0
        %665 = vmatpush1.bf16.msra.mxu0 0
        %666 = vmatprep.subr.bf16.mxu0 0
        %667 = vmatpush1.bf16.msra.mxu0 0
        %668 = vmatprep.subr.bf16.mxu0 0
        %669 = vmatpush1.bf16.msra.mxu0 0
        %670 = vmatprep.subr.bf16.mxu0 0
        %671 = vmatpush1.bf16.msra.mxu0 0
        %672 = vmatprep.subr.bf16.mxu0 0
        %673 = vmatpush1.bf16.msra.mxu0 0
        %674 = vmatprep.mubr.bf16.mxu0 0
        %675 = vmatmul.mubr.bf16.gmra.mrb[0].mxu0 %v358
        %v676 = vpop.f32.mrb[0].mxu0
        %v677 = vadd.f32 0.0, %v676
        %v678 = vpop.f32.mrb[0].mxu0
        %v679 = vpop.f32.mrb[0].mxu0
        %v680 = vadd.f32 0.0, %v679
        %v681 = vpop.f32.mrb[0].mxu0
        %682 = vdwg.mxu0
        %v685 = vunpack.c.l.b16 %v341
        %v686 = vunpack.c.l.b16 %v342
        %v687 = vpack.c.b16 %v686, %v685
        %689 = vmatprep.subr.bf16.mxu0 0
        %690 = vmatpush1.bf16.msra.mxu0 %v687
        %691 = vmatprep.subr.bf16.mxu0 0
        %692 = vmatpush1.bf16.msra.mxu0 0
        %693 = vmatprep.subr.bf16.mxu0 0
        %694 = vmatpush1.bf16.msra.mxu0 0
        %695 = vmatprep.subr.bf16.mxu0 0
        %696 = vmatpush1.bf16.msra.mxu0 0
        %697 = vmatprep.subr.bf16.mxu0 0
        %698 = vmatpush1.bf16.msra.mxu0 0
        %699 = vmatprep.subr.bf16.mxu0 0
        %700 = vmatpush1.bf16.msra.mxu0 0
        %701 = vmatprep.subr.bf16.mxu0 0
        %702 = vmatpush1.bf16.msra.mxu0 0
        %703 = vmatprep.subr.bf16.mxu0 0
        %704 = vmatpush1.bf16.msra.mxu0 0
        %705 = vmatprep.subr.bf16.mxu0 0
        %706 = vmatpush1.bf16.msra.mxu0 0
        %707 = vmatprep.subr.bf16.mxu0 0
        %708 = vmatpush1.bf16.msra.mxu0 0
        %709 = vmatprep.subr.bf16.mxu0 0
        %710 = vmatpush1.bf16.msra.mxu0 0
        %711 = vmatprep.subr.bf16.mxu0 0
        %712 = vmatpush1.bf16.msra.mxu0 0
        %713 = vmatprep.subr.bf16.mxu0 0
        %714 = vmatpush1.bf16.msra.mxu0 0
        %715 = vmatprep.subr.bf16.mxu0 0
        %716 = vmatpush1.bf16.msra.mxu0 0
        %717 = vmatprep.subr.bf16.mxu0 0
        %718 = vmatpush1.bf16.msra.mxu0 0
        %719 = vmatprep.subr.bf16.mxu0 0
        %720 = vmatpush1.bf16.msra.mxu0 0
        %721 = vmatprep.mubr.bf16.mxu0 0
        %722 = vmatmul.mubr.bf16.gmra.mrb[0].mxu0 %v358
        %v723 = vpop.f32.mrb[0].mxu0
        %v724 = vadd.f32 0.0, %v723
        %v725 = vpop.f32.mrb[0].mxu0
        %v726 = vpop.f32.mrb[0].mxu0
        %v727 = vadd.f32 0.0, %v726
        %v728 = vpop.f32.mrb[0].mxu0
        %729 = vdwg.mxu0
        %v730 = vpack.c.bf16 %v398, %v395
        %v731 = vpack.c.bf16 %v445, %v442
        %v732 = vpack.c.bf16 %v492, %v489
        %v733 = vpack.c.bf16 %v539, %v536
        %v734 = vpack.c.bf16 %v586, %v583
        %v735 = vpack.c.bf16 %v633, %v630
        %v736 = vpack.c.bf16 %v680, %v677
        %v737 = vpack.c.bf16 %v727, %v724
        %v738 = vld [vmem:[#allocation8] sm:$0xff]
        %v739 = vld [vmem:[#allocation8 + $0x8] sm:$0xff]
        %v740 = vld [vmem:[#allocation8 + $0x10] sm:$0xff]
        %v741 = vld [vmem:[#allocation8 + $0x18] sm:$0xff]
        %v742 = vld [vmem:[#allocation8 + $0x20] sm:$0xff]
        %v743 = vld [vmem:[#allocation8 + $0x28] sm:$0xff]
        %v744 = vld [vmem:[#allocation8 + $0x30] sm:$0xff]
        %v745 = vld [vmem:[#allocation8 + $0x38] sm:$0xff]
        %v746 = vld [vmem:[#allocation8 + $0x40] sm:$0xff]
        %v747 = vld [vmem:[#allocation8 + $0x48] sm:$0xff]
        %v748 = vld [vmem:[#allocation8 + $0x50] sm:$0xff]
        %v749 = vld [vmem:[#allocation8 + $0x58] sm:$0xff]
        %v750 = vld [vmem:[#allocation8 + $0x60] sm:$0xff]
        %v751 = vld [vmem:[#allocation8 + $0x68] sm:$0xff]
        %v752 = vld [vmem:[#allocation8 + $0x70] sm:$0xff]
        %v753 = vld [vmem:[#allocation8 + $0x78] sm:$0xff]
        %v754 = vld [vmem:[#allocation8 + $0x80] sm:$0xff]
        %v755 = vld [vmem:[#allocation8 + $0x88] sm:$0xff]
        %v756 = vld [vmem:[#allocation8 + $0x90] sm:$0xff]
        %v757 = vld [vmem:[#allocation8 + $0x98] sm:$0xff]
        %v758 = vld [vmem:[#allocation8 + $0xa0] sm:$0xff]
        %v759 = vld [vmem:[#allocation8 + $0xa8] sm:$0xff]
        %v760 = vld [vmem:[#allocation8 + $0xb0] sm:$0xff]
        %v761 = vld [vmem:[#allocation8 + $0xb8] sm:$0xff]
        %v762 = vld [vmem:[#allocation8 + $0xc0] sm:$0xff]
        %v763 = vld [vmem:[#allocation8 + $0xc8] sm:$0xff]
        %v764 = vld [vmem:[#allocation8 + $0xd0] sm:$0xff]
        %v765 = vld [vmem:[#allocation8 + $0xd8] sm:$0xff]
        %v766 = vld [vmem:[#allocation8 + $0xe0] sm:$0xff]
        %v767 = vld [vmem:[#allocation8 + $0xe8] sm:$0xff]
        %v768 = vld [vmem:[#allocation8 + $0xf0] sm:$0xff]
        %v769 = vld [vmem:[#allocation8 + $0xf8] sm:$0xff]
        %v770 = vld [vmem:[%s5] sm:$0xf]
        %v772 = vlaneseq
        %v773 = vshrl.u32 %v772, 7
        %v774 = vsub.s32 0, %v773
        %v775 = vrot.slane %v770, %v774
        %v776 = vlaneseq
        %v777 = vshrl.u32 %v776, 7
        %v778 = vsub.s32 1, %v777
        %v779 = vrot.slane %v770, %v778
        %v780 = vlaneseq
        %v781 = vshrl.u32 %v780, 7
        %v782 = vsub.s32 2, %v781
        %v783 = vrot.slane %v770, %v782
        %v784 = vlaneseq
        %v785 = vshrl.u32 %v784, 7
        %v786 = vsub.s32 3, %v785
        %v787 = vrot.slane %v770, %v786
        %v824 = vunpack.c.l.b16 %v738
        %v825 = vunpack.c.h.b16 %v738
        %v826 = vunpack.c.l.b16 %v739
        %v827 = vunpack.c.h.b16 %v739
        %v828 = vunpack.c.l.b16 %v740
        %v829 = vunpack.c.h.b16 %v740
        %v830 = vunpack.c.l.b16 %v741
        %v831 = vunpack.c.h.b16 %v741
        %v832 = vunpack.c.l.b16 %v742
        %v833 = vunpack.c.h.b16 %v742
        %v834 = vunpack.c.l.b16 %v743
        %v835 = vunpack.c.h.b16 %v743
        %v836 = vunpack.c.l.b16 %v744
        %v837 = vunpack.c.h.b16 %v744
        %v838 = vunpack.c.l.b16 %v745
        %v839 = vunpack.c.h.b16 %v745
        %v840 = vunpack.c.l.b16 %v746
        %v841 = vunpack.c.h.b16 %v746
        %v842 = vunpack.c.l.b16 %v747
        %v843 = vunpack.c.h.b16 %v747
        %v844 = vunpack.c.l.b16 %v748
        %v845 = vunpack.c.h.b16 %v748
        %v846 = vunpack.c.l.b16 %v749
        %v847 = vunpack.c.h.b16 %v749
        %v848 = vunpack.c.l.b16 %v750
        %v849 = vunpack.c.h.b16 %v750
        %v850 = vunpack.c.l.b16 %v751
        %v851 = vunpack.c.h.b16 %v751
        %v852 = vunpack.c.l.b16 %v752
        %v853 = vunpack.c.h.b16 %v752
        %v854 = vunpack.c.l.b16 %v753
        %v855 = vunpack.c.h.b16 %v753
        %v856 = vunpack.c.l.b16 %v754
        %v857 = vunpack.c.h.b16 %v754
        %v858 = vunpack.c.l.b16 %v755
        %v859 = vunpack.c.h.b16 %v755
        %v860 = vunpack.c.l.b16 %v756
        %v861 = vunpack.c.h.b16 %v756
        %v862 = vunpack.c.l.b16 %v757
        %v863 = vunpack.c.h.b16 %v757
        %v864 = vunpack.c.l.b16 %v758
        %v865 = vunpack.c.h.b16 %v758
        %v866 = vunpack.c.l.b16 %v759
        %v867 = vunpack.c.h.b16 %v759
        %v868 = vunpack.c.l.b16 %v760
        %v869 = vunpack.c.h.b16 %v760
        %v870 = vunpack.c.l.b16 %v761
        %v871 = vunpack.c.h.b16 %v761
        %v872 = vunpack.c.l.b16 %v762
        %v873 = vunpack.c.h.b16 %v762
        %v874 = vunpack.c.l.b16 %v763
        %v875 = vunpack.c.h.b16 %v763
        %v876 = vunpack.c.l.b16 %v764
        %v877 = vunpack.c.h.b16 %v764
        %v878 = vunpack.c.l.b16 %v765
        %v879 = vunpack.c.h.b16 %v765
        %v880 = vunpack.c.l.b16 %v766
        %v881 = vunpack.c.h.b16 %v766
        %v882 = vunpack.c.l.b16 %v767
        %v883 = vunpack.c.h.b16 %v767
        %v884 = vunpack.c.l.b16 %v768
        %v885 = vunpack.c.h.b16 %v768
        %v886 = vunpack.c.l.b16 %v769
        %v887 = vunpack.c.h.b16 %v769
        %v888 = vpack.c.b16 %v828, %v824
        %v889 = vpack.c.b16 %v829, %v825
        %v890 = vpack.c.b16 %v830, %v826
        %v891 = vpack.c.b16 %v831, %v827
        %v892 = vpack.c.b16 %v836, %v832
        %v893 = vpack.c.b16 %v837, %v833
        %v894 = vpack.c.b16 %v838, %v834
        %v895 = vpack.c.b16 %v839, %v835
        %v896 = vpack.c.b16 %v844, %v840
        %v897 = vpack.c.b16 %v845, %v841
        %v898 = vpack.c.b16 %v846, %v842
        %v899 = vpack.c.b16 %v847, %v843
        %v900 = vpack.c.b16 %v852, %v848
        %v901 = vpack.c.b16 %v853, %v849
        %v902 = vpack.c.b16 %v854, %v850
        %v903 = vpack.c.b16 %v855, %v851
        %v904 = vpack.c.b16 %v860, %v856
        %v905 = vpack.c.b16 %v861, %v857
        %v906 = vpack.c.b16 %v862, %v858
        %v907 = vpack.c.b16 %v863, %v859
        %v908 = vpack.c.b16 %v868, %v864
        %v909 = vpack.c.b16 %v869, %v865
        %v910 = vpack.c.b16 %v870, %v866
        %v911 = vpack.c.b16 %v871, %v867
        %v912 = vpack.c.b16 %v876, %v872
        %v913 = vpack.c.b16 %v877, %v873
        %v914 = vpack.c.b16 %v878, %v874
        %v915 = vpack.c.b16 %v879, %v875
        %v916 = vpack.c.b16 %v884, %v880
        %v917 = vpack.c.b16 %v885, %v881
        %v918 = vpack.c.b16 %v886, %v882
        %v919 = vpack.c.b16 %v887, %v883
        %952 = vmatprep.subr.bf16.mxu0 %v889
        %953 = vmatpush1.bf16.msra.mxu0 %v888
        %954 = vmatprep.subr.bf16.mxu0 %v893
        %955 = vmatpush1.bf16.msra.mxu0 %v892
        %956 = vmatprep.subr.bf16.mxu0 %v897
        %957 = vmatpush1.bf16.msra.mxu0 %v896
        %958 = vmatprep.subr.bf16.mxu0 %v901
        %959 = vmatpush1.bf16.msra.mxu0 %v900
        %960 = vmatprep.subr.bf16.mxu0 %v905
        %961 = vmatpush1.bf16.msra.mxu0 %v904
        %962 = vmatprep.subr.bf16.mxu0 %v909
        %963 = vmatpush1.bf16.msra.mxu0 %v908
        %964 = vmatprep.subr.bf16.mxu0 %v913
        %965 = vmatpush1.bf16.msra.mxu0 %v912
        %966 = vmatprep.subr.bf16.mxu0 %v917
        %967 = vmatpush1.bf16.msra.mxu0 %v916
        %968 = vmatprep.subr.bf16.mxu0 0
        %969 = vmatpush1.bf16.msra.mxu0 0
        %970 = vmatprep.subr.bf16.mxu0 0
        %971 = vmatpush1.bf16.msra.mxu0 0
        %972 = vmatprep.subr.bf16.mxu0 0
        %973 = vmatpush1.bf16.msra.mxu0 0
        %974 = vmatprep.subr.bf16.mxu0 0
        %975 = vmatpush1.bf16.msra.mxu0 0
        %976 = vmatprep.subr.bf16.mxu0 0
        %977 = vmatpush1.bf16.msra.mxu0 0
        %978 = vmatprep.subr.bf16.mxu0 0
        %979 = vmatpush1.bf16.msra.mxu0 0
        %980 = vmatprep.subr.bf16.mxu0 0
        %981 = vmatpush1.bf16.msra.mxu0 0
        %982 = vmatprep.subr.bf16.mxu0 0
        %983 = vmatpush1.bf16.msra.mxu0 0
        %984 = vmatprep.mubr.bf16.mxu0 0
        %985 = vmatmul.mubr.bf16.gmra.mrb[0].mxu0 %v730
        %v986 = vpop.f32.mrb[0].mxu0
        %v987 = vadd.f32 %v775, %v986
        %v988 = vpop.f32.mrb[0].mxu0
        %v989 = vadd.f32 %v779, %v988
        %v990 = vpop.f32.mrb[0].mxu0
        %v991 = vadd.f32 %v775, %v990
        %v992 = vpop.f32.mrb[0].mxu0
        %v993 = vadd.f32 %v779, %v992
        %994 = vmatprep.mubr.bf16.mxu0 0
        %995 = vmatmul.mubr.bf16.gmra.mrb[0].mxu0 %v731
        %v996 = vpop.f32.mrb[0].mxu0
        %v997 = vadd.f32 %v775, %v996
        %v998 = vpop.f32.mrb[0].mxu0
        %v999 = vadd.f32 %v779, %v998
        %v1000 = vpop.f32.mrb[0].mxu0
        %v1001 = vadd.f32 %v775, %v1000
        %v1002 = vpop.f32.mrb[0].mxu0
        %v1003 = vadd.f32 %v779, %v1002
        %1004 = vmatprep.mubr.bf16.mxu0 0
        %1005 = vmatmul.mubr.bf16.gmra.mrb[0].mxu0 %v732
        %v1006 = vpop.f32.mrb[0].mxu0
        %v1007 = vadd.f32 %v775, %v1006
        %v1008 = vpop.f32.mrb[0].mxu0
        %v1009 = vadd.f32 %v779, %v1008
        %v1010 = vpop.f32.mrb[0].mxu0
        %v1011 = vadd.f32 %v775, %v1010
        %v1012 = vpop.f32.mrb[0].mxu0
        %v1013 = vadd.f32 %v779, %v1012
        %1014 = vmatprep.mubr.bf16.mxu0 0
        %1015 = vmatmul.mubr.bf16.gmra.mrb[0].mxu0 %v733
        %v1016 = vpop.f32.mrb[0].mxu0
        %v1017 = vadd.f32 %v775, %v1016
        %v1018 = vpop.f32.mrb[0].mxu0
        %v1019 = vadd.f32 %v779, %v1018
        %v1020 = vpop.f32.mrb[0].mxu0
        %v1021 = vadd.f32 %v775, %v1020
        %v1022 = vpop.f32.mrb[0].mxu0
        %v1023 = vadd.f32 %v779, %v1022
        %1024 = vmatprep.mubr.bf16.mxu0 0
        %1025 = vmatmul.mubr.bf16.gmra.mrb[0].mxu0 %v734
        %v1026 = vpop.f32.mrb[0].mxu0
        %v1027 = vadd.f32 %v775, %v1026
        %v1028 = vpop.f32.mrb[0].mxu0
        %v1029 = vadd.f32 %v779, %v1028
        %v1030 = vpop.f32.mrb[0].mxu0
        %v1031 = vadd.f32 %v775, %v1030
        %v1032 = vpop.f32.mrb[0].mxu0
        %v1033 = vadd.f32 %v779, %v1032
        %1034 = vmatprep.mubr.bf16.mxu0 0
        %1035 = vmatmul.mubr.bf16.gmra.mrb[0].mxu0 %v735
        %v1036 = vpop.f32.mrb[0].mxu0
        %v1037 = vadd.f32 %v775, %v1036
        %v1038 = vpop.f32.mrb[0].mxu0
        %v1039 = vadd.f32 %v779, %v1038
        %v1040 = vpop.f32.mrb[0].mxu0
        %v1041 = vadd.f32 %v775, %v1040
        %v1042 = vpop.f32.mrb[0].mxu0
        %v1043 = vadd.f32 %v779, %v1042
        %1044 = vmatprep.mubr.bf16.mxu0 0
        %1045 = vmatmul.mubr.bf16.gmra.mrb[0].mxu0 %v736
        %v1046 = vpop.f32.mrb[0].mxu0
        %v1047 = vadd.f32 %v775, %v1046
        %v1048 = vpop.f32.mrb[0].mxu0
        %v1049 = vadd.f32 %v779, %v1048
        %v1050 = vpop.f32.mrb[0].mxu0
        %v1051 = vadd.f32 %v775, %v1050
        %v1052 = vpop.f32.mrb[0].mxu0
        %v1053 = vadd.f32 %v779, %v1052
        %1054 = vmatprep.mubr.bf16.mxu0 0
        %1055 = vmatmul.mubr.bf16.gmra.mrb[0].mxu0 %v737
        %v1056 = vpop.f32.mrb[0].mxu0
        %v1057 = vadd.f32 %v775, %v1056
        %v1058 = vpop.f32.mrb[0].mxu0
        %v1059 = vadd.f32 %v779, %v1058
        %v1060 = vpop.f32.mrb[0].mxu0
        %v1061 = vadd.f32 %v775, %v1060
        %v1062 = vpop.f32.mrb[0].mxu0
        %v1063 = vadd.f32 %v779, %v1062
        %1064 = vdwg.mxu0
        %1065 = vmatprep.subr.bf16.mxu0 %v891
        %1066 = vmatpush1.bf16.msra.mxu0 %v890
        %1067 = vmatprep.subr.bf16.mxu0 %v895
        %1068 = vmatpush1.bf16.msra.mxu0 %v894
        %1069 = vmatprep.subr.bf16.mxu0 %v899
        %1070 = vmatpush1.bf16.msra.mxu0 %v898
        %1071 = vmatprep.subr.bf16.mxu0 %v903
        %1072 = vmatpush1.bf16.msra.mxu0 %v902
        %1073 = vmatprep.subr.bf16.mxu0 %v907
        %1074 = vmatpush1.bf16.msra.mxu0 %v906
        %1075 = vmatprep.subr.bf16.mxu0 %v911
        %1076 = vmatpush1.bf16.msra.mxu0 %v910
        %1077 = vmatprep.subr.bf16.mxu0 %v915
        %1078 = vmatpush1.bf16.msra.mxu0 %v914
        %1079 = vmatprep.subr.bf16.mxu0 %v919
        %1080 = vmatpush1.bf16.msra.mxu0 %v918
        %1081 = vmatprep.subr.bf16.mxu0 0
        %1082 = vmatpush1.bf16.msra.mxu0 0
        %1083 = vmatprep.subr.bf16.mxu0 0
        %1084 = vmatpush1.bf16.msra.mxu0 0
        %1085 = vmatprep.subr.bf16.mxu0 0
        %1086 = vmatpush1.bf16.msra.mxu0 0
        %1087 = vmatprep.subr.bf16.mxu0 0
        %1088 = vmatpush1.bf16.msra.mxu0 0
        %1089 = vmatprep.subr.bf16.mxu0 0
        %1090 = vmatpush1.bf16.msra.mxu0 0
        %1091 = vmatprep.subr.bf16.mxu0 0
        %1092 = vmatpush1.bf16.msra.mxu0 0
        %1093 = vmatprep.subr.bf16.mxu0 0
        %1094 = vmatpush1.bf16.msra.mxu0 0
        %1095 = vmatprep.subr.bf16.mxu0 0
        %1096 = vmatpush1.bf16.msra.mxu0 0
        %1097 = vmatprep.mubr.bf16.mxu0 0
        %1098 = vmatmul.mubr.bf16.gmra.mrb[0].mxu0 %v730
        %v1099 = vpop.f32.mrb[0].mxu0
        %v1100 = vadd.f32 %v783, %v1099
        %v1101 = vpop.f32.mrb[0].mxu0
        %v1102 = vadd.f32 %v787, %v1101
        %v1103 = vpop.f32.mrb[0].mxu0
        %v1104 = vadd.f32 %v783, %v1103
        %v1105 = vpop.f32.mrb[0].mxu0
        %v1106 = vadd.f32 %v787, %v1105
        %1107 = vmatprep.mubr.bf16.mxu0 0
        %1108 = vmatmul.mubr.bf16.gmra.mrb[0].mxu0 %v731
        %v1109 = vpop.f32.mrb[0].mxu0
        %v1110 = vadd.f32 %v783, %v1109
        %v1111 = vpop.f32.mrb[0].mxu0
        %v1112 = vadd.f32 %v787, %v1111
        %v1113 = vpop.f32.mrb[0].mxu0
        %v1114 = vadd.f32 %v783, %v1113
        %v1115 = vpop.f32.mrb[0].mxu0
        %v1116 = vadd.f32 %v787, %v1115
        %1117 = vmatprep.mubr.bf16.mxu0 0
        %1118 = vmatmul.mubr.bf16.gmra.mrb[0].mxu0 %v732
        %v1119 = vpop.f32.mrb[0].mxu0
        %v1120 = vadd.f32 %v783, %v1119
        %v1121 = vpop.f32.mrb[0].mxu0
        %v1122 = vadd.f32 %v787, %v1121
        %v1123 = vpop.f32.mrb[0].mxu0
        %v1124 = vadd.f32 %v783, %v1123
        %v1125 = vpop.f32.mrb[0].mxu0
        %v1126 = vadd.f32 %v787, %v1125
        %1127 = vmatprep.mubr.bf16.mxu0 0
        %1128 = vmatmul.mubr.bf16.gmra.mrb[0].mxu0 %v733
        %v1129 = vpop.f32.mrb[0].mxu0
        %v1130 = vadd.f32 %v783, %v1129
        %v1131 = vpop.f32.mrb[0].mxu0
        %v1132 = vadd.f32 %v787, %v1131
        %v1133 = vpop.f32.mrb[0].mxu0
        %v1134 = vadd.f32 %v783, %v1133
        %v1135 = vpop.f32.mrb[0].mxu0
        %v1136 = vadd.f32 %v787, %v1135
        %1137 = vmatprep.mubr.bf16.mxu0 0
        %1138 = vmatmul.mubr.bf16.gmra.mrb[0].mxu0 %v734
        %v1139 = vpop.f32.mrb[0].mxu0
        %v1140 = vadd.f32 %v783, %v1139
        %v1141 = vpop.f32.mrb[0].mxu0
        %v1142 = vadd.f32 %v787, %v1141
        %v1143 = vpop.f32.mrb[0].mxu0
        %v1144 = vadd.f32 %v783, %v1143
        %v1145 = vpop.f32.mrb[0].mxu0
        %v1146 = vadd.f32 %v787, %v1145
        %1147 = vmatprep.mubr.bf16.mxu0 0
        %1148 = vmatmul.mubr.bf16.gmra.mrb[0].mxu0 %v735
        %v1149 = vpop.f32.mrb[0].mxu0
        %v1150 = vadd.f32 %v783, %v1149
        %v1151 = vpop.f32.mrb[0].mxu0
        %v1152 = vadd.f32 %v787, %v1151
        %v1153 = vpop.f32.mrb[0].mxu0
        %v1154 = vadd.f32 %v783, %v1153
        %v1155 = vpop.f32.mrb[0].mxu0
        %v1156 = vadd.f32 %v787, %v1155
        %1157 = vmatprep.mubr.bf16.mxu0 0
        %1158 = vmatmul.mubr.bf16.gmra.mrb[0].mxu0 %v736
        %v1159 = vpop.f32.mrb[0].mxu0
        %v1160 = vadd.f32 %v783, %v1159
        %v1161 = vpop.f32.mrb[0].mxu0
        %v1162 = vadd.f32 %v787, %v1161
        %v1163 = vpop.f32.mrb[0].mxu0
        %v1164 = vadd.f32 %v783, %v1163
        %v1165 = vpop.f32.mrb[0].mxu0
        %v1166 = vadd.f32 %v787, %v1165
        %1167 = vmatprep.mubr.bf16.mxu0 0
        %1168 = vmatmul.mubr.bf16.gmra.mrb[0].mxu0 %v737
        %v1169 = vpop.f32.mrb[0].mxu0
        %v1170 = vadd.f32 %v783, %v1169
        %v1171 = vpop.f32.mrb[0].mxu0
        %v1172 = vadd.f32 %v787, %v1171
        %v1173 = vpop.f32.mrb[0].mxu0
        %v1174 = vadd.f32 %v783, %v1173
        %v1175 = vpop.f32.mrb[0].mxu0
        %v1176 = vadd.f32 %v787, %v1175
        %1177 = vdwg.mxu0
        %v1178 = vxor.u32 %v987, 2147483648
        %v1179 = vxor.u32 %v989, 2147483648
        %v1180 = vxor.u32 %v991, 2147483648
        %v1181 = vxor.u32 %v993, 2147483648
        %v1182 = vxor.u32 %v997, 2147483648
        %v1183 = vxor.u32 %v999, 2147483648
        %v1184 = vxor.u32 %v1001, 2147483648
        %v1185 = vxor.u32 %v1003, 2147483648
        %v1186 = vxor.u32 %v1007, 2147483648
        %v1187 = vxor.u32 %v1009, 2147483648
        %v1188 = vxor.u32 %v1011, 2147483648
        %v1189 = vxor.u32 %v1013, 2147483648
        %v1190 = vxor.u32 %v1017, 2147483648
        %v1191 = vxor.u32 %v1019, 2147483648
        %v1192 = vxor.u32 %v1021, 2147483648
        %v1193 = vxor.u32 %v1023, 2147483648
        %v1194 = vxor.u32 %v1027, 2147483648
        %v1195 = vxor.u32 %v1029, 2147483648
        %v1196 = vxor.u32 %v1031, 2147483648
        %v1197 = vxor.u32 %v1033, 2147483648
        %v1198 = vxor.u32 %v1037, 2147483648
        %v1199 = vxor.u32 %v1039, 2147483648
        %v1200 = vxor.u32 %v1041, 2147483648
        %v1201 = vxor.u32 %v1043, 2147483648
        %v1202 = vxor.u32 %v1047, 2147483648
        %v1203 = vxor.u32 %v1049, 2147483648
        %v1204 = vxor.u32 %v1051, 2147483648
        %v1205 = vxor.u32 %v1053, 2147483648
        %v1206 = vxor.u32 %v1057, 2147483648
        %v1207 = vxor.u32 %v1059, 2147483648
        %v1208 = vxor.u32 %v1061, 2147483648
        %v1209 = vxor.u32 %v1063, 2147483648
        %v1210 = vmul.f32 %v1178, 1.442695
        %v1211 = vpow.pop %v1210
        %v1212 = vmul.f32 %v1179, 1.442695
        %v1213 = vpow.pop %v1212
        %v1214 = vmul.f32 %v1180, 1.442695
        %v1215 = vpow.pop %v1214
        %v1216 = vmul.f32 %v1181, 1.442695
        %v1217 = vpow.pop %v1216
        %v1218 = vmul.f32 %v1182, 1.442695
        %v1219 = vpow.pop %v1218
        %v1220 = vmul.f32 %v1183, 1.442695
        %v1221 = vpow.pop %v1220
        %v1222 = vmul.f32 %v1184, 1.442695
        %v1223 = vpow.pop %v1222
        %v1224 = vmul.f32 %v1185, 1.442695
        %v1225 = vpow.pop %v1224
        %v1226 = vmul.f32 %v1186, 1.442695
        %v1227 = vpow.pop %v1226
        %v1228 = vmul.f32 %v1187, 1.442695
        %v1229 = vpow.pop %v1228
        %v1230 = vmul.f32 %v1188, 1.442695
        %v1231 = vpow.pop %v1230
        %v1232 = vmul.f32 %v1189, 1.442695
        %v1233 = vpow.pop %v1232
        %v1234 = vmul.f32 %v1190, 1.442695
        %v1235 = vpow.pop %v1234
        %v1236 = vmul.f32 %v1191, 1.442695
        %v1237 = vpow.pop %v1236
        %v1238 = vmul.f32 %v1192, 1.442695
        %v1239 = vpow.pop %v1238
        %v1240 = vmul.f32 %v1193, 1.442695
        %v1241 = vpow.pop %v1240
        %v1242 = vmul.f32 %v1194, 1.442695
        %v1243 = vpow.pop %v1242
        %v1244 = vmul.f32 %v1195, 1.442695
        %v1245 = vpow.pop %v1244
        %v1246 = vmul.f32 %v1196, 1.442695
        %v1247 = vpow.pop %v1246
        %v1248 = vmul.f32 %v1197, 1.442695
        %v1249 = vpow.pop %v1248
        %v1250 = vmul.f32 %v1198, 1.442695
        %v1251 = vpow.pop %v1250
        %v1252 = vmul.f32 %v1199, 1.442695
        %v1253 = vpow.pop %v1252
        %v1254 = vmul.f32 %v1200, 1.442695
        %v1255 = vpow.pop %v1254
        %v1256 = vmul.f32 %v1201, 1.442695
        %v1257 = vpow.pop %v1256
        %v1258 = vmul.f32 %v1202, 1.442695
        %v1259 = vpow.pop %v1258
        %v1260 = vmul.f32 %v1203, 1.442695
        %v1261 = vpow.pop %v1260
        %v1262 = vmul.f32 %v1204, 1.442695
        %v1263 = vpow.pop %v1262
        %v1264 = vmul.f32 %v1205, 1.442695
        %v1265 = vpow.pop %v1264
        %v1266 = vmul.f32 %v1206, 1.442695
        %v1267 = vpow.pop %v1266
        %v1268 = vmul.f32 %v1207, 1.442695
        %v1269 = vpow.pop %v1268
        %v1270 = vmul.f32 %v1208, 1.442695
        %v1271 = vpow.pop %v1270
        %v1272 = vmul.f32 %v1209, 1.442695
        %v1273 = vpow.pop %v1272
        %v1274 = vadd.f32 %v1211, 1.0
        %v1275 = vadd.f32 %v1213, 1.0
        %v1276 = vadd.f32 %v1215, 1.0
        %v1277 = vadd.f32 %v1217, 1.0
        %v1278 = vadd.f32 %v1219, 1.0
        %v1279 = vadd.f32 %v1221, 1.0
        %v1280 = vadd.f32 %v1223, 1.0
        %v1281 = vadd.f32 %v1225, 1.0
        %v1282 = vadd.f32 %v1227, 1.0
        %v1283 = vadd.f32 %v1229, 1.0
        %v1284 = vadd.f32 %v1231, 1.0
        %v1285 = vadd.f32 %v1233, 1.0
        %v1286 = vadd.f32 %v1235, 1.0
        %v1287 = vadd.f32 %v1237, 1.0
        %v1288 = vadd.f32 %v1239, 1.0
        %v1289 = vadd.f32 %v1241, 1.0
        %v1290 = vadd.f32 %v1243, 1.0
        %v1291 = vadd.f32 %v1245, 1.0
        %v1292 = vadd.f32 %v1247, 1.0
        %v1293 = vadd.f32 %v1249, 1.0
        %v1294 = vadd.f32 %v1251, 1.0
        %v1295 = vadd.f32 %v1253, 1.0
        %v1296 = vadd.f32 %v1255, 1.0
        %v1297 = vadd.f32 %v1257, 1.0
        %v1298 = vadd.f32 %v1259, 1.0
        %v1299 = vadd.f32 %v1261, 1.0
        %v1300 = vadd.f32 %v1263, 1.0
        %v1301 = vadd.f32 %v1265, 1.0
        %v1302 = vadd.f32 %v1267, 1.0
        %v1303 = vadd.f32 %v1269, 1.0
        %v1304 = vadd.f32 %v1271, 1.0
        %v1305 = vadd.f32 %v1273, 1.0
        %v1306 = vrcp.pop %v1274
        %v1307 = vmul.f32 1.0, %v1306
        %v1308 = vrcp.pop %v1275
        %v1309 = vmul.f32 1.0, %v1308
        %v1310 = vrcp.pop %v1276
        %v1311 = vmul.f32 1.0, %v1310
        %v1312 = vrcp.pop %v1277
        %v1313 = vmul.f32 1.0, %v1312
        %v1314 = vrcp.pop %v1278
        %v1315 = vmul.f32 1.0, %v1314
        %v1316 = vrcp.pop %v1279
        %v1317 = vmul.f32 1.0, %v1316
        %v1318 = vrcp.pop %v1280
        %v1319 = vmul.f32 1.0, %v1318
        %v1320 = vrcp.pop %v1281
        %v1321 = vmul.f32 1.0, %v1320
        %v1322 = vrcp.pop %v1282
        %v1323 = vmul.f32 1.0, %v1322
        %v1324 = vrcp.pop %v1283
        %v1325 = vmul.f32 1.0, %v1324
        %v1326 = vrcp.pop %v1284
        %v1327 = vmul.f32 1.0, %v1326
        %v1328 = vrcp.pop %v1285
        %v1329 = vmul.f32 1.0, %v1328
        %v1330 = vrcp.pop %v1286
        %v1331 = vmul.f32 1.0, %v1330
        %v1332 = vrcp.pop %v1287
        %v1333 = vmul.f32 1.0, %v1332
        %v1334 = vrcp.pop %v1288
        %v1335 = vmul.f32 1.0, %v1334
        %v1336 = vrcp.pop %v1289
        %v1337 = vmul.f32 1.0, %v1336
        %v1338 = vrcp.pop %v1290
        %v1339 = vmul.f32 1.0, %v1338
        %v1340 = vrcp.pop %v1291
        %v1341 = vmul.f32 1.0, %v1340
        %v1342 = vrcp.pop %v1292
        %v1343 = vmul.f32 1.0, %v1342
        %v1344 = vrcp.pop %v1293
        %v1345 = vmul.f32 1.0, %v1344
        %v1346 = vrcp.pop %v1294
        %v1347 = vmul.f32 1.0, %v1346
        %v1348 = vrcp.pop %v1295
        %v1349 = vmul.f32 1.0, %v1348
        %v1350 = vrcp.pop %v1296
        %v1351 = vmul.f32 1.0, %v1350
        %v1352 = vrcp.pop %v1297
        %v1353 = vmul.f32 1.0, %v1352
        %v1354 = vrcp.pop %v1298
        %v1355 = vmul.f32 1.0, %v1354
        %v1356 = vrcp.pop %v1299
        %v1357 = vmul.f32 1.0, %v1356
        %v1358 = vrcp.pop %v1300
        %v1359 = vmul.f32 1.0, %v1358
        %v1360 = vrcp.pop %v1301
        %v1361 = vmul.f32 1.0, %v1360
        %v1362 = vrcp.pop %v1302
        %v1363 = vmul.f32 1.0, %v1362
        %v1364 = vrcp.pop %v1303
        %v1365 = vmul.f32 1.0, %v1364
        %v1366 = vrcp.pop %v1304
        %v1367 = vmul.f32 1.0, %v1366
        %v1368 = vrcp.pop %v1305
        %v1369 = vmul.f32 1.0, %v1368
        %v1370 = vtanh.pop %v1100
        %v1371 = vtanh.pop %v1102
        %v1372 = vtanh.pop %v1104
        %v1373 = vtanh.pop %v1106
        %v1374 = vtanh.pop %v1110
        %v1375 = vtanh.pop %v1112
        %v1376 = vtanh.pop %v1114
        %v1377 = vtanh.pop %v1116
        %v1378 = vtanh.pop %v1120
        %v1379 = vtanh.pop %v1122
        %v1380 = vtanh.pop %v1124
        %v1381 = vtanh.pop %v1126
        %v1382 = vtanh.pop %v1130
        %v1383 = vtanh.pop %v1132
        %v1384 = vtanh.pop %v1134
        %v1385 = vtanh.pop %v1136
        %v1386 = vtanh.pop %v1140
        %v1387 = vtanh.pop %v1142
        %v1388 = vtanh.pop %v1144
        %v1389 = vtanh.pop %v1146
        %v1390 = vtanh.pop %v1150
        %v1391 = vtanh.pop %v1152
        %v1392 = vtanh.pop %v1154
        %v1393 = vtanh.pop %v1156
        %v1394 = vtanh.pop %v1160
        %v1395 = vtanh.pop %v1162
        %v1396 = vtanh.pop %v1164
        %v1397 = vtanh.pop %v1166
        %v1398 = vtanh.pop %v1170
        %v1399 = vtanh.pop %v1172
        %v1400 = vtanh.pop %v1174
        %v1401 = vtanh.pop %v1176
        %v1402 = vsub.f32 1.0, %v1307
        %v1403 = vsub.f32 1.0, %v1309
        %v1404 = vsub.f32 1.0, %v1311
        %v1405 = vsub.f32 1.0, %v1313
        %v1406 = vsub.f32 1.0, %v1315
        %v1407 = vsub.f32 1.0, %v1317
        %v1408 = vsub.f32 1.0, %v1319
        %v1409 = vsub.f32 1.0, %v1321
        %v1410 = vsub.f32 1.0, %v1323
        %v1411 = vsub.f32 1.0, %v1325
        %v1412 = vsub.f32 1.0, %v1327
        %v1413 = vsub.f32 1.0, %v1329
        %v1414 = vsub.f32 1.0, %v1331
        %v1415 = vsub.f32 1.0, %v1333
        %v1416 = vsub.f32 1.0, %v1335
        %v1417 = vsub.f32 1.0, %v1337
        %v1418 = vsub.f32 1.0, %v1339
        %v1419 = vsub.f32 1.0, %v1341
        %v1420 = vsub.f32 1.0, %v1343
        %v1421 = vsub.f32 1.0, %v1345
        %v1422 = vsub.f32 1.0, %v1347
        %v1423 = vsub.f32 1.0, %v1349
        %v1424 = vsub.f32 1.0, %v1351
        %v1425 = vsub.f32 1.0, %v1353
        %v1426 = vsub.f32 1.0, %v1355
        %v1427 = vsub.f32 1.0, %v1357
        %v1428 = vsub.f32 1.0, %v1359
        %v1429 = vsub.f32 1.0, %v1361
        %v1430 = vsub.f32 1.0, %v1363
        %v1431 = vsub.f32 1.0, %v1365
        %v1432 = vsub.f32 1.0, %v1367
        %v1433 = vsub.f32 1.0, %v1369
        %v1434 = vmul.f32 %v1402, %v1370
        %v1435 = vmul.f32 %v1403, %v1371
        %v1436 = vmul.f32 %v1404, %v1372
        %v1437 = vmul.f32 %v1405, %v1373
        %v1438 = vmul.f32 %v1406, %v1374
        %v1439 = vmul.f32 %v1407, %v1375
        %v1440 = vmul.f32 %v1408, %v1376
        %v1441 = vmul.f32 %v1409, %v1377
        %v1442 = vmul.f32 %v1410, %v1378
        %v1443 = vmul.f32 %v1411, %v1379
        %v1444 = vmul.f32 %v1412, %v1380
        %v1445 = vmul.f32 %v1413, %v1381
        %v1446 = vmul.f32 %v1414, %v1382
        %v1447 = vmul.f32 %v1415, %v1383
        %v1448 = vmul.f32 %v1416, %v1384
        %v1449 = vmul.f32 %v1417, %v1385
        %v1450 = vmul.f32 %v1418, %v1386
        %v1451 = vmul.f32 %v1419, %v1387
        %v1452 = vmul.f32 %v1420, %v1388
        %v1453 = vmul.f32 %v1421, %v1389
        %v1454 = vmul.f32 %v1422, %v1390
        %v1455 = vmul.f32 %v1423, %v1391
        %v1456 = vmul.f32 %v1424, %v1392
        %v1457 = vmul.f32 %v1425, %v1393
        %v1458 = vmul.f32 %v1426, %v1394
        %v1459 = vmul.f32 %v1427, %v1395
        %v1460 = vmul.f32 %v1428, %v1396
        %v1461 = vmul.f32 %v1429, %v1397
        %v1462 = vmul.f32 %v1430, %v1398
        %v1463 = vmul.f32 %v1431, %v1399
        %v1464 = vmul.f32 %v1432, %v1400
        %v1465 = vmul.f32 %v1433, %v1401
        %s1466 = sld [smem:[#allocation3]]
        %v1467 = vstv %s1466
        %v1468 = vmul.f32 %v1467, %v1434
        %v1469 = vmul.f32 %v1467, %v1435
        %v1470 = vmul.f32 %v1467, %v1436
        %v1471 = vmul.f32 %v1467, %v1437
        %s1472 = sld [smem:[#allocation3 + $0x1]]
        %v1473 = vstv %s1472
        %v1474 = vmul.f32 %v1473, %v1438
        %v1475 = vmul.f32 %v1473, %v1439
        %v1476 = vmul.f32 %v1473, %v1440
        %v1477 = vmul.f32 %v1473, %v1441
        %v1478 = vadd.f32 %v1468, %v1474
        %v1479 = vadd.f32 %v1469, %v1475
        %v1480 = vadd.f32 %v1470, %v1476
        %v1481 = vadd.f32 %v1471, %v1477
        %s1482 = sld [smem:[#allocation3 + $0x2]]
        %v1483 = vstv %s1482
        %v1484 = vmul.f32 %v1483, %v1442
        %v1485 = vmul.f32 %v1483, %v1443
        %v1486 = vmul.f32 %v1483, %v1444
        %v1487 = vmul.f32 %v1483, %v1445
        %v1488 = vadd.f32 %v1478, %v1484
        %v1489 = vadd.f32 %v1479, %v1485
        %v1490 = vadd.f32 %v1480, %v1486
        %v1491 = vadd.f32 %v1481, %v1487
        %s1492 = sld [smem:[#allocation3 + $0x3]]
        %v1493 = vstv %s1492
        %v1494 = vmul.f32 %v1493, %v1446
        %v1495 = vmul.f32 %v1493, %v1447
        %v1496 = vmul.f32 %v1493, %v1448
        %v1497 = vmul.f32 %v1493, %v1449
        %v1498 = vadd.f32 %v1488, %v1494
        %v1499 = vadd.f32 %v1489, %v1495
        %v1500 = vadd.f32 %v1490, %v1496
        %v1501 = vadd.f32 %v1491, %v1497
        %s1502 = sld [smem:[#allocation3 + $0x4]]
        %v1503 = vstv %s1502
        %v1504 = vmul.f32 %v1503, %v1450
        %v1505 = vmul.f32 %v1503, %v1451
        %v1506 = vmul.f32 %v1503, %v1452
        %v1507 = vmul.f32 %v1503, %v1453
        %v1508 = vadd.f32 %v1498, %v1504
        %v1509 = vadd.f32 %v1499, %v1505
        %v1510 = vadd.f32 %v1500, %v1506
        %v1511 = vadd.f32 %v1501, %v1507
        %s1512 = sld [smem:[#allocation3 + $0x5]]
        %v1513 = vstv %s1512
        %v1514 = vmul.f32 %v1513, %v1454
        %v1515 = vmul.f32 %v1513, %v1455
        %v1516 = vmul.f32 %v1513, %v1456
        %v1517 = vmul.f32 %v1513, %v1457
        %v1518 = vadd.f32 %v1508, %v1514
        %v1519 = vadd.f32 %v1509, %v1515
        %v1520 = vadd.f32 %v1510, %v1516
        %v1521 = vadd.f32 %v1511, %v1517
        %s1522 = sld [smem:[#allocation3 + $0x6]]
        %v1523 = vstv %s1522
        %v1524 = vmul.f32 %v1523, %v1458
        %v1525 = vmul.f32 %v1523, %v1459
        %v1526 = vmul.f32 %v1523, %v1460
        %v1527 = vmul.f32 %v1523, %v1461
        %v1528 = vadd.f32 %v1518, %v1524
        %v1529 = vadd.f32 %v1519, %v1525
        %v1530 = vadd.f32 %v1520, %v1526
        %v1531 = vadd.f32 %v1521, %v1527
        %s1532 = sld [smem:[#allocation3 + $0x7]]
        %v1533 = vstv %s1532
        %v1534 = vmul.f32 %v1533, %v1462
        %v1535 = vmul.f32 %v1533, %v1463
        %v1536 = vmul.f32 %v1533, %v1464
        %v1537 = vmul.f32 %v1533, %v1465
        %v1538 = vadd.f32 %v1528, %v1534
        %v1539 = vadd.f32 %v1529, %v1535
        %v1540 = vadd.f32 %v1530, %v1536
        %v1541 = vadd.f32 %v1531, %v1537
        %v1542 = vmax.f32 %v1538, 0.0
        %v1543 = vmax.f32 %v1539, 0.0
        %v1544 = vmax.f32 %v1540, 0.0
        %v1545 = vmax.f32 %v1541, 0.0
        %v1546 = vld [vmem:[%s6] sm:$0x3]
        %v1548 = vlaneseq
        %v1549 = vshrl.u32 %v1548, 7
        %v1550 = vsub.s32 0, %v1549
        %v1551 = vrot.slane %v1546, %v1550
        %v1552 = vlaneseq
        %v1553 = vshrl.u32 %v1552, 7
        %v1554 = vsub.s32 1, %v1553
        %v1555 = vrot.slane %v1546, %v1554
        %v1558 = vmul.f32 %v1542, %v1551
        %v1559 = vmul.f32 %v1543, %v1555
        %v1560 = vmul.f32 %v1544, %v1551
        %v1561 = vmul.f32 %v1545, %v1555
        %v1562 = vadd.f32 %v1558, %v1559
        %1563 = vadd.xlane.f32.xlu0 %v1562
        %v1564 = vpop.xlane.xlu0 %1563
        %v1565 = vadd.f32 %v1560, %v1561
        %1566 = vadd.xlane.f32.xlu0 %v1565
        %v1567 = vpop.xlane.xlu0 %1566
        %s1568 = sld [smem:[#allocation2]]
        %v1569 = vstv %s1568
        %v1570 = vadd.f32 %v1564, %v1569
        %v1571 = vadd.f32 %v1567, %v1569
        %v1574 = vlaneseq
        %v1575 = vand.u32 %v1574, 127
        %v1576 = vlaneseq
        %v1577 = vshrl.u32 %v1576, 7
        %v1578 = vsub.s32 %v1575, %v1577
        %v1579 = vrot.slane %v1570, %v1578
        %v1580 = vadd.s32 %v1575, 4294967288
        %v1581 = vlaneseq
        %v1582 = vshrl.u32 %v1581, 7
        %v1583 = vsub.s32 %v1580, %v1582
        %v1584 = vrot.slane %v1571, %v1583
        %vm1585 = vcmask 130112
        %v1586 = vsel %vm1585, %v1584, %v1579
        %vm1588 = vcmask 122880
        %1589 = vst.msk [vmem:[%s325] sm:$0x1] %vm1588, %v1586
        %s1590 = sand.u32 %s187, 1
        %s1591 = scalar_lea.sflag [#allocation5], %s1590
        %s1592 = sand.u32 %s187, 1
        %s1593 = scalar_lea.vmem [#allocation10], %s1592
        // Predicated region
        $region61: #{tpu_custom_call.1} parent=47 // pred_check
          %p1594 = pneg %p197
        $region62: #{tpu_custom_call.1} parent=47 // pred_check_branch
          %1596 = sbr.rel (%p1594) target = $region64
        $region63: #{tpu_custom_call.1} parent=47 // pred_region
          %s1598 = ssub.s32 16, 16
          %1599 = vsyncadd %s1591, %s1598
          %s1600 = smul.addr %s27, 16
          %s1601 = scalar_lea.hbm %s7, %s1600
          %s1603 = sshll.u32 %s1593, 4
          %s1604 = int_to_ptr.vmem [resolvable:$true] %s1603
          %1606 = dma.vmem_to_hbm [thread:$0]  %s1604, 16, %s1601, %s1591
        $region64: #{tpu_custom_call.1} parent=47 // pred_fallthru
          _
      $region48: #{tpu_custom_call.1} parent=5 // pred_fallthru
        _
      %p1607 = scmp.le.s32.totalorder 2, %s22
      // Predicated region
      $region65: #{tpu_custom_call.1} parent=5 // pred_check
        %p1608 = pneg %p1607
      $region66: #{tpu_custom_call.1} parent=5 // pred_check_branch
        %1610 = sbr.rel (%p1608) target = $region68
      $region67: #{tpu_custom_call.1} parent=5 // pred_region
        %s1611 = ssub.s32 %s22, 2
        // Predicated region
        $region69: #{tpu_custom_call.1} parent=67 // pred_check
          %p1612 = pneg %p203
        $region70: #{tpu_custom_call.1} parent=67 // pred_check_branch
          %1614 = sbr.rel (%p1612) target = $region72
        $region71: #{tpu_custom_call.1} parent=67 // pred_region
          %s1615 = sand.u32 %s188, 1
          %s1616 = scalar_lea.sflag [#allocation5], %s1615
          %s1617 = sand.u32 %s188, 1
          %s1618 = scalar_lea.vmem [#allocation10], %s1617
          %1619 = dma.done %s1616, 16
        $region72: #{tpu_custom_call.1} parent=67 // pred_fallthru
          _
      $region68: #{tpu_custom_call.1} parent=5 // pred_fallthru
        _
    $region6: #{tpu_custom_call.1} parent=1 // loop_footer
      %s26 = sadd.s32 1, %s22
    $region7: #{tpu_custom_call.1} parent=1 // loop_footer_branch
      %21 = sbr.rel target = $region3
    $region8: #{tpu_custom_call.1} parent=1 // loop_exit
      _
    %1620 = vsyncpa [#allocation4], 1
    %s1621 = scalar_lea.sflag [#allocation4], 1
    %1622 = vsyncpa %s1621, 1
    %1623 = vsyncpa [#allocation9], 1
    %1624 = vsyncpa [#allocation5], 1
    %s1625 = scalar_lea.sflag [#allocation5], 1
    %1626 = vsyncpa %s1625, 1
    %1627 = vsyncpa [#allocation6], 1
    %s1628 = scalar_lea.sflag [#allocation6], 1
    %1629 = vsyncpa %s1628, 1

</llo_original>
